<compile_context>
chip_gen: v6e
topology: v6e:2x2x1
jax: 0.10.0
libtpu: 0.0.40
codegen_flags: <defaults>
</compile_context>

<pallas_src>
import functools

import jax
import jax.numpy as jnp
from jax import lax
from jax.experimental import pallas as pl
from jax.experimental.pallas import tpu as pltpu

HIDDEN = 64
VOCAB = 100            # len(string.printable)
LANE = 128             # TPU lane width
VOCAB_PAD = 128        # table rows padded to a multiple of 8 (full tiles)
MAX_CHUNK = 256        # tokens processed per grid step


def _round_up(n, m):
    return ((n + m - 1) // m) * m


def _gru_chunk_kernel(toks_ref,      # SMEM scalar prefetch: (T_pad,) int32
                      xg_ref,        # (VOCAB_PAD, 3*LANE) f32 x-side gate table
                      wh_ref,        # (LANE, 3*LANE) f32 h-side gate weights
                      bh_ref,        # (1, 3*LANE) f32 (b_hn in the n block)
                      fcw_ref,       # (LANE, LANE) f32 fc weights
                      fcb_ref,       # (1, LANE) f32 fc bias
                      h0_ref,        # (1, LANE) f32 initial hidden
                      logits_ref,    # out block (CHUNK, LANE) at chunk c
                      hout_ref,      # out block (1, LANE) final hidden
                      h_sc,          # VMEM (1, LANE) hidden carry across chunks
                      hist_sc,       # VMEM (CHUNK, LANE) h_t rows for batched fc
                      *, t_total, chunk):
    c = pl.program_id(0)

    @pl.when(c == 0)
    def _():
        h_sc[...] = h0_ref[...]

    base = c * chunk
    wh = wh_ref[...]
    bh = bh_ref[...]

    def step(i, h):
        tok = toks_ref[base + i]
        gx = xg_ref[pl.ds(tok, 1), :]                        # (1, 3*LANE)
        gh = jnp.dot(h, wh, preferred_element_type=jnp.float32) + bh
        # one fused sigmoid over the r|z blocks (single EUP push)
        rz = jax.nn.sigmoid(gx[:, 0:2 * LANE] + gh[:, 0:2 * LANE])
        r = rz[:, 0:LANE]
        z = rz[:, LANE:2 * LANE]
        n = jnp.tanh(gx[:, 2 * LANE:3 * LANE] + r * gh[:, 2 * LANE:3 * LANE])
        h_new = (1.0 - z) * n + z * h
        # mask padding steps (T not a multiple of CHUNK): hidden is unchanged
        h_new = jnp.where(base + i < t_total, h_new, h)
        hist_sc[pl.ds(i, 1), :] = h_new
        return h_new

    h_fin = lax.fori_loop(0, chunk, step, h_sc[...], unroll=8)
    h_sc[...] = h_fin
    hout_ref[...] = h_fin        # resident block (constant index), flushed once

    # Batched FC for the whole chunk: one (CHUNK,128)x(128,128) matmul + bias,
    # written as a full lane/sublane-dense tile.
    logits_ref[...] = (
        jnp.dot(hist_sc[...], fcw_ref[...], preferred_element_type=jnp.float32)
        + fcb_ref[...]
    )


def prepare_params(params):
    """Fold / pad the torch-layout weights once (plain JAX, f32)."""
    emb, wih, whh, bih, bhh, fcw, fcb = params
    H = HIDDEN

    def chunk3(a):
        return a[0:H], a[H:2 * H], a[2 * H:3 * H]

    w_ir, w_iz, w_in = chunk3(wih)
    w_hr, w_hz, w_hn = chunk3(whh)
    b_ir, b_iz, b_in = chunk3(bih)
    b_hr, b_hz, b_hn = chunk3(bhh)

    emb = emb.astype(jnp.float32)
    # x-side gate table: embedding folded into the input gate weights + biases.
    gx_r = emb @ w_ir.T + (b_ir + b_hr)       # (VOCAB, H)
    gx_z = emb @ w_iz.T + (b_iz + b_hz)
    gx_n = emb @ w_in.T + b_in
    xg = jnp.zeros((VOCAB_PAD, 3 * LANE), jnp.float32)
    xg = xg.at[:VOCAB, 0 * LANE:0 * LANE + H].set(gx_r)
    xg = xg.at[:VOCAB, 1 * LANE:1 * LANE + H].set(gx_z)
    xg = xg.at[:VOCAB, 2 * LANE:2 * LANE + H].set(gx_n)

    # h-side weights: rows [0:H) multiply h lanes [0:H); outputs in lanes [0:H)
    # of each 128-lane gate block [r | z | n].
    wh = jnp.zeros((LANE, 3 * LANE), jnp.float32)
    wh = wh.at[0:H, 0 * LANE:0 * LANE + H].set(w_hr.T)
    wh = wh.at[0:H, 1 * LANE:1 * LANE + H].set(w_hz.T)
    wh = wh.at[0:H, 2 * LANE:2 * LANE + H].set(w_hn.T)

    # b_hn must stay on the h-side (n = tanh(i_n + r * (W_hn h + b_hn))).
    bh = jnp.zeros((1, 3 * LANE), jnp.float32)
    bh = bh.at[0, 2 * LANE:2 * LANE + H].set(b_hn)

    fcw_pad = jnp.zeros((LANE, LANE), jnp.float32)
    fcw_pad = fcw_pad.at[0:H, 0:VOCAB].set(fcw.T)
    fcb_pad = jnp.zeros((1, LANE), jnp.float32).at[0, 0:VOCAB].set(fcb)

    return xg, wh, bh, fcw_pad, fcb_pad


@jax.jit
def rnn_forward_sequence(tokens, hidden0, prep):
    """tokens: int32 (T,); hidden0: (1,1,H) f32.
    Returns (logits (T, VOCAB), final hidden (1,1,H)) -- equivalent to calling
    the torch module's forward T times feeding the hidden state through."""
    xg, wh, bh, fcw_pad, fcb_pad = prep
    T = tokens.shape[0]
    chunk = min(MAX_CHUNK, _round_up(max(T, 1), 8))
    num_chunks = (T + chunk - 1) // chunk
    t_pad = num_chunks * chunk

    # TODO(synk): PyTorch would raise on out-of-range token ids; we clip.
    toks = jnp.clip(tokens.astype(jnp.int32), 0, VOCAB - 1)
    toks = jnp.pad(toks, (0, t_pad - T))

    h0_pad = jnp.zeros((1, LANE), jnp.float32)
    h0_pad = h0_pad.at[0, 0:HIDDEN].set(
        hidden0.reshape(HIDDEN).astype(jnp.float32))

    const = lambda shape: pl.BlockSpec(shape, lambda c, tk: (0, 0))

    grid_spec = pltpu.PrefetchScalarGridSpec(
        num_scalar_prefetch=1,
        grid=(num_chunks,),
        in_specs=[
            const(xg.shape),          # weights / tables: constant index_map ->
            const(wh.shape),          # VMEM-resident for the whole sequence
            const(bh.shape),
            const(fcw_pad.shape),
            const(fcb_pad.shape),
            const(h0_pad.shape),
        ],
        out_specs=[
            pl.BlockSpec((chunk, LANE), lambda c, tk: (c, 0)),  # chunk logits
            pl.BlockSpec((1, LANE), lambda c, tk: (0, 0)),      # final hidden
        ],
        scratch_shapes=[
            pltpu.VMEM((1, LANE), jnp.float32),       # hidden carry
            pltpu.VMEM((chunk, LANE), jnp.float32),   # per-chunk h_t history
        ],
    )

    kernel = functools.partial(_gru_chunk_kernel, t_total=T, chunk=chunk)

    logits_pad, hout_pad = pl.pallas_call(
        kernel,
        out_shape=(
            jax.ShapeDtypeStruct((t_pad, LANE), jnp.float32),
            jax.ShapeDtypeStruct((1, LANE), jnp.float32),
        ),
        grid_spec=grid_spec,
        compiler_params=pltpu.CompilerParams(
            dimension_semantics=("arbitrary",)),   # sequential recurrence
    )(toks, xg, wh, bh, fcw_pad, fcb_pad, h0_pad)

    logits = logits_pad[:T, :VOCAB]
    hidden = hout_pad[:, 0:HIDDEN].reshape(1, 1, HIDDEN)
    return logits, hidden


def rnn_forward(tok, hidden, prep):
    """Single-step forward, exactly the torch module semantics (seq=1, batch=1)."""
    tokens = jnp.asarray(tok, dtype=jnp.int32).reshape(-1)     # (1,)
    return rnn_forward_sequence(tokens, hidden, prep)


def _reference_sequence(tokens, hidden0, params):
    """Pure-JAX f32 reference mirroring torch GRU semantics (gate order r,z,n)."""
    emb, wih, whh, bih, bhh, fcw, fcb = params
    h = hidden0.reshape(HIDDEN)
    outs = []
    for tok in [int(v) for v in jnp.asarray(tokens)]:
        x = emb[tok]
        gi = wih @ x + bih
        gh = whh @ h + bhh
        i_r, i_z, i_n = gi[:HIDDEN], gi[HIDDEN:2 * HIDDEN], gi[2 * HIDDEN:]
        h_r, h_z, h_n = gh[:HIDDEN], gh[HIDDEN:2 * HIDDEN], gh[2 * HIDDEN:]
        r = jax.nn.sigmoid(i_r + h_r)
        z = jax.nn.sigmoid(i_z + h_z)
        n = jnp.tanh(i_n + r * h_n)
        h = (1.0 - z) * n + z * h
        outs.append(fcw @ h + fcb)
    return jnp.stack(outs), h.reshape(1, 1, HIDDEN)


if __name__ == "__main__":
    key = jax.random.PRNGKey(0)
    keys = jax.random.split(key, 9)
    bound = 1.0 / jnp.sqrt(HIDDEN)

    emb = jax.random.normal(keys[0], (VOCAB, HIDDEN), jnp.float32)
    wih = jax.random.uniform(keys[1], (3 * HIDDEN, HIDDEN), jnp.float32, -bound, bound)
    whh = jax.random.uniform(keys[2], (3 * HIDDEN, HIDDEN), jnp.float32, -bound, bound)
    bih = jax.random.uniform(keys[3], (3 * HIDDEN,), jnp.float32, -bound, bound)
    bhh = jax.random.uniform(keys[4], (3 * HIDDEN,), jnp.float32, -bound, bound)
    fcw = jax.random.uniform(keys[5], (VOCAB, HIDDEN), jnp.float32, -bound, bound)
    fcb = jax.random.uniform(keys[6], (VOCAB,), jnp.float32, -bound, bound)
    params = (emb, wih, whh, bih, bhh, fcw, fcb)
    prep = prepare_params(params)

    hidden0 = jax.random.normal(keys[7], (1, 1, HIDDEN), jnp.float32)
    T = 8
    tokens = jax.random.randint(keys[8], (T,), 0, VOCAB, dtype=jnp.int32)

    # Whole-sequence call (recurrence runs inside one pallas_call).
    logits_seq, hidden_T = rnn_forward_sequence(tokens, hidden0, prep)
    jax.block_until_ready((logits_seq, hidden_T))

    ref_logits, ref_hidden = _reference_sequence(tokens, hidden0, params)
    assert logits_seq.shape == (T, VOCAB) and hidden_T.shape == (1, 1, HIDDEN)
    assert jnp.allclose(logits_seq, ref_logits, atol=5e-2, rtol=5e-2), \
        float(jnp.max(jnp.abs(logits_seq - ref_logits)))
    assert jnp.allclose(hidden_T, ref_hidden, atol=5e-2, rtol=5e-2), \
        float(jnp.max(jnp.abs(hidden_T - ref_hidden)))

    # Single-step call matching the PyTorch module's forward (seq=1, batch=1).
    # (T=1 < CHUNK also exercises the masked-padding-step path.)
    logits1, hidden1 = rnn_forward(tokens[:1], hidden0, prep)
    jax.block_until_ready((logits1, hidden1))
    ref_logits1, ref_hidden1 = _reference_sequence(tokens[:1], hidden0, params)
    assert logits1.shape == (1, VOCAB) and hidden1.shape == (1, 1, HIDDEN)
    assert jnp.allclose(logits1, ref_logits1, atol=5e-2, rtol=5e-2)
    assert jnp.allclose(hidden1, ref_hidden1, atol=5e-2, rtol=5e-2)

    # NOTE: a batch (B>1) / multi-sequence leading "parallel" grid axis would
    # be the next step to occupy both v7x TensorCores, but the module is batch=1.
    print("KERNEL_OK")
</pallas_src>

<mosaic_0001>
module attributes {stable_mosaic.version = 11 : i64} {
  func.func @_gru_chunk_kernel(%arg0: i32, %arg1: memref<8xi32, #tpu.memory_space<smem>>, %arg2: memref<128x384xf32, #tpu.memory_space<vmem>>, %arg3: memref<128x384xf32, #tpu.memory_space<vmem>>, %arg4: memref<1x384xf32, #tpu.memory_space<vmem>>, %arg5: memref<128x128xf32, #tpu.memory_space<vmem>>, %arg6: memref<1x128xf32, #tpu.memory_space<vmem>>, %arg7: memref<1x128xf32, #tpu.memory_space<vmem>>, %arg8: memref<8x128xf32, #tpu.memory_space<vmem>>, %arg9: memref<1x128xf32, #tpu.memory_space<vmem>>, %arg10: memref<1x128xf32, #tpu.memory_space<vmem>>, %arg11: memref<8x128xf32, #tpu.memory_space<vmem>>) attributes {dimension_semantics = [#tpu.dimension_semantics<arbitrary>], iteration_bounds = array<i64: 1>, scalar_prefetch = 1 : i64, scratch_operands = 2 : i64, tpu.core_type = #tpu.core_type<tc>, window_params = [{pipeline_mode = #tpu.pipeline_mode<synchronous>, transform_indices = @transform_0, window_bounds = array<i64: 128, 384>}, {pipeline_mode = #tpu.pipeline_mode<synchronous>, transform_indices = @transform_1, window_bounds = array<i64: 128, 384>}, {pipeline_mode = #tpu.pipeline_mode<synchronous>, transform_indices = @transform_2, window_bounds = array<i64: 1, 384>}, {pipeline_mode = #tpu.pipeline_mode<synchronous>, transform_indices = @transform_3, window_bounds = array<i64: 128, 128>}, {pipeline_mode = #tpu.pipeline_mode<synchronous>, transform_indices = @transform_4, window_bounds = array<i64: 1, 128>}, {pipeline_mode = #tpu.pipeline_mode<synchronous>, transform_indices = @transform_5, window_bounds = array<i64: 1, 128>}, {transform_indices = @transform_6, window_bounds = array<i64: 8, 128>}, {pipeline_mode = #tpu.pipeline_mode<synchronous>, transform_indices = @transform_7, window_bounds = array<i64: 1, 128>}]} {
    %c0_i32 = arith.constant 0 : i32
    %0 = arith.cmpi eq, %arg0, %c0_i32 : i32
    %1 = arith.extui %0 : i1 to i32
    %c0_i32_0 = arith.constant 0 : i32
    %2 = arith.cmpi ne, %1, %c0_i32_0 : i32
    scf.if %2 {
      %c0_68 = arith.constant 0 : index
      %c0_69 = arith.constant 0 : index
      %272 = vector.load %arg7[%c0_68, %c0_69] : memref<1x128xf32, #tpu.memory_space<vmem>>, vector<1x128xf32>
      %c0_70 = arith.constant 0 : index
      %c0_71 = arith.constant 0 : index
      %273 = vector.load %arg10[%c0_70, %c0_71] : memref<1x128xf32, #tpu.memory_space<vmem>>, vector<1x128xf32>
      tpu.vector_store %arg10[%c0_70, %c0_71], %272 {strides = array<i32>} : memref<1x128xf32, #tpu.memory_space<vmem>>, vector<1x128xf32>,
    } else {
    }
    %c8_i32 = arith.constant 8 : i32
    %3 = arith.muli %arg0, %c8_i32 : i32
    %c0 = arith.constant 0 : index
    %c0_1 = arith.constant 0 : index
    %4 = vector.load %arg3[%c0, %c0_1] : memref<128x384xf32, #tpu.memory_space<vmem>>, vector<128x384xf32>
    %c0_2 = arith.constant 0 : index
    %c0_3 = arith.constant 0 : index
    %5 = vector.load %arg4[%c0_2, %c0_3] : memref<1x384xf32, #tpu.memory_space<vmem>>, vector<1x384xf32>
    %c0_4 = arith.constant 0 : index
    %c0_5 = arith.constant 0 : index
    %6 = vector.load %arg10[%c0_4, %c0_5] : memref<1x128xf32, #tpu.memory_space<vmem>>, vector<1x128xf32>
    %c0_i32_6 = arith.constant 0 : i32
    %7 = arith.addi %3, %c0_i32_6 : i32
    %8 = arith.index_cast %7 : i32 to index
    %9 = memref.load %arg1[%8] : memref<8xi32, #tpu.memory_space<smem>>
    %10 = arith.index_cast %9 : i32 to index
    %c0_7 = arith.constant 0 : index
    %11 = vector.load %arg2[%10, %c0_7] : memref<128x384xf32, #tpu.memory_space<vmem>>, vector<1x384xf32>
    %cst = arith.constant dense<0.000000e+00> : vector<1x384xf32>
    %12 = tpu.matmul %6, %4, %cst {dimension_numbers = #tpu.dot_dimension_numbers<[1], [0], [0], [1], [0, 0, 1, 1], [], []>} : vector<1x128xf32>, vector<128x384xf32>, vector<1x384xf32> -> vector<1x384xf32>
    %13 = arith.addf %12, %5 : vector<1x384xf32>
    %14 = vector.extract_strided_slice %11 {offsets = [0, 0], sizes = [1, 256], strides = [1, 1]} : vector<1x384xf32> to vector<1x256xf32>
    %15 = vector.extract_strided_slice %13 {offsets = [0, 0], sizes = [1, 256], strides = [1, 1]} : vector<1x384xf32> to vector<1x256xf32>
    %16 = arith.addf %14, %15 : vector<1x256xf32>
    %17 = arith.negf %16 : vector<1x256xf32>
    %18 = math.exp %17 : vector<1x256xf32>
    %cst_8 = arith.constant 1.000000e+00 : f32
    %19 = vector.broadcast %cst_8 : f32 to vector<1x256xf32>
    %20 = arith.addf %19, %18 : vector<1x256xf32>
    %21 = arith.divf %19, %20 : vector<1x256xf32>
    %22 = vector.extract_strided_slice %21 {offsets = [0, 0], sizes = [1, 128], strides = [1, 1]} : vector<1x256xf32> to vector<1x128xf32>
    %23 = vector.extract_strided_slice %21 {offsets = [0, 128], sizes = [1, 128], strides = [1, 1]} : vector<1x256xf32> to vector<1x128xf32>
    %24 = vector.extract_strided_slice %11 {offsets = [0, 256], sizes = [1, 128], strides = [1, 1]} : vector<1x384xf32> to vector<1x128xf32>
    %25 = vector.extract_strided_slice %13 {offsets = [0, 256], sizes = [1, 128], strides = [1, 1]} : vector<1x384xf32> to vector<1x128xf32>
    %26 = arith.mulf %22, %25 : vector<1x128xf32>
    %27 = arith.addf %24, %26 : vector<1x128xf32>
    %28 = math.tanh %27 : vector<1x128xf32>
    %cst_9 = arith.constant 1.000000e+00 : f32
    %29 = vector.broadcast %cst_9 : f32 to vector<1x128xf32>
    %30 = arith.subf %29, %23 : vector<1x128xf32>
    %31 = arith.mulf %30, %28 : vector<1x128xf32>
    %32 = arith.mulf %23, %6 : vector<1x128xf32>
    %33 = arith.addf %31, %32 : vector<1x128xf32>
    %34 = arith.addi %3, %c0_i32_6 : i32
    %c8_i32_10 = arith.constant 8 : i32
    %35 = arith.cmpi slt, %34, %c8_i32_10 : i32
    %36 = arith.select %35, %33, %6 : vector<1x128xf32>
    %37 = arith.index_cast %c0_i32_6 : i32 to index
    %c0_11 = arith.constant 0 : index
    %38 = vector.load %arg11[%37, %c0_11] : memref<8x128xf32, #tpu.memory_space<vmem>>, vector<1x128xf32>
    tpu.vector_store %arg11[%37, %c0_11], %36 {strides = array<i32>} : memref<8x128xf32, #tpu.memory_space<vmem>>, vector<1x128xf32>,
    %c1_i32 = arith.constant 1 : i32
    %39 = arith.addi %3, %c1_i32 : i32
    %40 = arith.index_cast %39 : i32 to index
    %41 = memref.load %arg1[%40] : memref<8xi32, #tpu.memory_space<smem>>
    %42 = arith.index_cast %41 : i32 to index
    %c0_12 = arith.constant 0 : index
    %43 = vector.load %arg2[%42, %c0_12] : memref<128x384xf32, #tpu.memory_space<vmem>>, vector<1x384xf32>
    %cst_13 = arith.constant dense<0.000000e+00> : vector<1x384xf32>
    %44 = tpu.matmul %36, %4, %cst_13 {dimension_numbers = #tpu.dot_dimension_numbers<[1], [0], [0], [1], [0, 0, 1, 1], [], []>} : vector<1x128xf32>, vector<128x384xf32>, vector<1x384xf32> -> vector<1x384xf32>
    %45 = arith.addf %44, %5 : vector<1x384xf32>
    %46 = vector.extract_strided_slice %43 {offsets = [0, 0], sizes = [1, 256], strides = [1, 1]} : vector<1x384xf32> to vector<1x256xf32>
    %47 = vector.extract_strided_slice %45 {offsets = [0, 0], sizes = [1, 256], strides = [1, 1]} : vector<1x384xf32> to vector<1x256xf32>
    %48 = arith.addf %46, %47 : vector<1x256xf32>
    %49 = arith.negf %48 : vector<1x256xf32>
    %50 = math.exp %49 : vector<1x256xf32>
    %cst_14 = arith.constant 1.000000e+00 : f32
    %51 = vector.broadcast %cst_14 : f32 to vector<1x256xf32>
    %52 = arith.addf %51, %50 : vector<1x256xf32>
    %53 = arith.divf %51, %52 : vector<1x256xf32>
    %54 = vector.extract_strided_slice %53 {offsets = [0, 0], sizes = [1, 128], strides = [1, 1]} : vector<1x256xf32> to vector<1x128xf32>
    %55 = vector.extract_strided_slice %53 {offsets = [0, 128], sizes = [1, 128], strides = [1, 1]} : vector<1x256xf32> to vector<1x128xf32>
    %56 = vector.extract_strided_slice %43 {offsets = [0, 256], sizes = [1, 128], strides = [1, 1]} : vector<1x384xf32> to vector<1x128xf32>
    %57 = vector.extract_strided_slice %45 {offsets = [0, 256], sizes = [1, 128], strides = [1, 1]} : vector<1x384xf32> to vector<1x128xf32>
    %58 = arith.mulf %54, %57 : vector<1x128xf32>
    %59 = arith.addf %56, %58 : vector<1x128xf32>
    %60 = math.tanh %59 : vector<1x128xf32>
    %cst_15 = arith.constant 1.000000e+00 : f32
    %61 = vector.broadcast %cst_15 : f32 to vector<1x128xf32>
    %62 = arith.subf %61, %55 : vector<1x128xf32>
    %63 = arith.mulf %62, %60 : vector<1x128xf32>
    %64 = arith.mulf %55, %36 : vector<1x128xf32>
    %65 = arith.addf %63, %64 : vector<1x128xf32>
    %66 = arith.addi %3, %c1_i32 : i32
    %c8_i32_16 = arith.constant 8 : i32
    %67 = arith.cmpi slt, %66, %c8_i32_16 : i32
    %68 = arith.select %67, %65, %36 : vector<1x128xf32>
    %69 = arith.index_cast %c1_i32 : i32 to index
    %c0_17 = arith.constant 0 : index
    %70 = vector.load %arg11[%69, %c0_17] : memref<8x128xf32, #tpu.memory_space<vmem>>, vector<1x128xf32>
    tpu.vector_store %arg11[%69, %c0_17], %68 {strides = array<i32>} : memref<8x128xf32, #tpu.memory_space<vmem>>, vector<1x128xf32>,
    %c2_i32 = arith.constant 2 : i32
    %71 = arith.addi %3, %c2_i32 : i32
    %72 = arith.index_cast %71 : i32 to index
    %73 = memref.load %arg1[%72] : memref<8xi32, #tpu.memory_space<smem>>
    %74 = arith.index_cast %73 : i32 to index
    %c0_18 = arith.constant 0 : index
    %75 = vector.load %arg2[%74, %c0_18] : memref<128x384xf32, #tpu.memory_space<vmem>>, vector<1x384xf32>
    %cst_19 = arith.constant dense<0.000000e+00> : vector<1x384xf32>
    %76 = tpu.matmul %68, %4, %cst_19 {dimension_numbers = #tpu.dot_dimension_numbers<[1], [0], [0], [1], [0, 0, 1, 1], [], []>} : vector<1x128xf32>, vector<128x384xf32>, vector<1x384xf32> -> vector<1x384xf32>
    %77 = arith.addf %76, %5 : vector<1x384xf32>
    %78 = vector.extract_strided_slice %75 {offsets = [0, 0], sizes = [1, 256], strides = [1, 1]} : vector<1x384xf32> to vector<1x256xf32>
    %79 = vector.extract_strided_slice %77 {offsets = [0, 0], sizes = [1, 256], strides = [1, 1]} : vector<1x384xf32> to vector<1x256xf32>
    %80 = arith.addf %78, %79 : vector<1x256xf32>
    %81 = arith.negf %80 : vector<1x256xf32>
    %82 = math.exp %81 : vector<1x256xf32>
    %cst_20 = arith.constant 1.000000e+00 : f32
    %83 = vector.broadcast %cst_20 : f32 to vector<1x256xf32>
    %84 = arith.addf %83, %82 : vector<1x256xf32>
    %85 = arith.divf %83, %84 : vector<1x256xf32>
    %86 = vector.extract_strided_slice %85 {offsets = [0, 0], sizes = [1, 128], strides = [1, 1]} : vector<1x256xf32> to vector<1x128xf32>
    %87 = vector.extract_strided_slice %85 {offsets = [0, 128], sizes = [1, 128], strides = [1, 1]} : vector<1x256xf32> to vector<1x128xf32>
    %88 = vector.extract_strided_slice %75 {offsets = [0, 256], sizes = [1, 128], strides = [1, 1]} : vector<1x384xf32> to vector<1x128xf32>
    %89 = vector.extract_strided_slice %77 {offsets = [0, 256], sizes = [1, 128], strides = [1, 1]} : vector<1x384xf32> to vector<1x128xf32>
    %90 = arith.mulf %86, %89 : vector<1x128xf32>
    %91 = arith.addf %88, %90 : vector<1x128xf32>
    %92 = math.tanh %91 : vector<1x128xf32>
    %cst_21 = arith.constant 1.000000e+00 : f32
    %93 = vector.broadcast %cst_21 : f32 to vector<1x128xf32>
    %94 = arith.subf %93, %87 : vector<1x128xf32>
    %95 = arith.mulf %94, %92 : vector<1x128xf32>
    %96 = arith.mulf %87, %68 : vector<1x128xf32>
    %97 = arith.addf %95, %96 : vector<1x128xf32>
    %98 = arith.addi %3, %c2_i32 : i32
    %c8_i32_22 = arith.constant 8 : i32
    %99 = arith.cmpi slt, %98, %c8_i32_22 : i32
    %100 = arith.select %99, %97, %68 : vector<1x128xf32>
    %101 = arith.index_cast %c2_i32 : i32 to index
    %c0_23 = arith.constant 0 : index
    %102 = vector.load %arg11[%101, %c0_23] : memref<8x128xf32, #tpu.memory_space<vmem>>, vector<1x128xf32>
    tpu.vector_store %arg11[%101, %c0_23], %100 {strides = array<i32>} : memref<8x128xf32, #tpu.memory_space<vmem>>, vector<1x128xf32>,
    %c3_i32 = arith.constant 3 : i32
    %103 = arith.addi %3, %c3_i32 : i32
    %104 = arith.index_cast %103 : i32 to index
    %105 = memref.load %arg1[%104] : memref<8xi32, #tpu.memory_space<smem>>
    %106 = arith.index_cast %105 : i32 to index
    %c0_24 = arith.constant 0 : index
    %107 = vector.load %arg2[%106, %c0_24] : memref<128x384xf32, #tpu.memory_space<vmem>>, vector<1x384xf32>
    %cst_25 = arith.constant dense<0.000000e+00> : vector<1x384xf32>
    %108 = tpu.matmul %100, %4, %cst_25 {dimension_numbers = #tpu.dot_dimension_numbers<[1], [0], [0], [1], [0, 0, 1, 1], [], []>} : vector<1x128xf32>, vector<128x384xf32>, vector<1x384xf32> -> vector<1x384xf32>
    %109 = arith.addf %108, %5 : vector<1x384xf32>
    %110 = vector.extract_strided_slice %107 {offsets = [0, 0], sizes = [1, 256], strides = [1, 1]} : vector<1x384xf32> to vector<1x256xf32>
    %111 = vector.extract_strided_slice %109 {offsets = [0, 0], sizes = [1, 256], strides = [1, 1]} : vector<1x384xf32> to vector<1x256xf32>
    %112 = arith.addf %110, %111 : vector<1x256xf32>
    %113 = arith.negf %112 : vector<1x256xf32>
    %114 = math.exp %113 : vector<1x256xf32>
    %cst_26 = arith.constant 1.000000e+00 : f32
    %115 = vector.broadcast %cst_26 : f32 to vector<1x256xf32>
    %116 = arith.addf %115, %114 : vector<1x256xf32>
    %117 = arith.divf %115, %116 : vector<1x256xf32>
    %118 = vector.extract_strided_slice %117 {offsets = [0, 0], sizes = [1, 128], strides = [1, 1]} : vector<1x256xf32> to vector<1x128xf32>
    %119 = vector.extract_strided_slice %117 {offsets = [0, 128], sizes = [1, 128], strides = [1, 1]} : vector<1x256xf32> to vector<1x128xf32>
    %120 = vector.extract_strided_slice %107 {offsets = [0, 256], sizes = [1, 128], strides = [1, 1]} : vector<1x384xf32> to vector<1x128xf32>
    %121 = vector.extract_strided_slice %109 {offsets = [0, 256], sizes = [1, 128], strides = [1, 1]} : vector<1x384xf32> to vector<1x128xf32>
    %122 = arith.mulf %118, %121 : vector<1x128xf32>
    %123 = arith.addf %120, %122 : vector<1x128xf32>
    %124 = math.tanh %123 : vector<1x128xf32>
    %cst_27 = arith.constant 1.000000e+00 : f32
    %125 = vector.broadcast %cst_27 : f32 to vector<1x128xf32>
    %126 = arith.subf %125, %119 : vector<1x128xf32>
    %127 = arith.mulf %126, %124 : vector<1x128xf32>
    %128 = arith.mulf %119, %100 : vector<1x128xf32>
    %129 = arith.addf %127, %128 : vector<1x128xf32>
    %130 = arith.addi %3, %c3_i32 : i32
    %c8_i32_28 = arith.constant 8 : i32
    %131 = arith.cmpi slt, %130, %c8_i32_28 : i32
    %132 = arith.select %131, %129, %100 : vector<1x128xf32>
    %133 = arith.index_cast %c3_i32 : i32 to index
    %c0_29 = arith.constant 0 : index
    %134 = vector.load %arg11[%133, %c0_29] : memref<8x128xf32, #tpu.memory_space<vmem>>, vector<1x128xf32>
    tpu.vector_store %arg11[%133, %c0_29], %132 {strides = array<i32>} : memref<8x128xf32, #tpu.memory_space<vmem>>, vector<1x128xf32>,
    %c4_i32 = arith.constant 4 : i32
    %135 = arith.addi %3, %c4_i32 : i32
    %136 = arith.index_cast %135 : i32 to index
    %137 = memref.load %arg1[%136] : memref<8xi32, #tpu.memory_space<smem>>
    %138 = arith.index_cast %137 : i32 to index
    %c0_30 = arith.constant 0 : index
    %139 = vector.load %arg2[%138, %c0_30] : memref<128x384xf32, #tpu.memory_space<vmem>>, vector<1x384xf32>
    %cst_31 = arith.constant dense<0.000000e+00> : vector<1x384xf32>
    %140 = tpu.matmul %132, %4, %cst_31 {dimension_numbers = #tpu.dot_dimension_numbers<[1], [0], [0], [1], [0, 0, 1, 1], [], []>} : vector<1x128xf32>, vector<128x384xf32>, vector<1x384xf32> -> vector<1x384xf32>
    %141 = arith.addf %140, %5 : vector<1x384xf32>
    %142 = vector.extract_strided_slice %139 {offsets = [0, 0], sizes = [1, 256], strides = [1, 1]} : vector<1x384xf32> to vector<1x256xf32>
    %143 = vector.extract_strided_slice %141 {offsets = [0, 0], sizes = [1, 256], strides = [1, 1]} : vector<1x384xf32> to vector<1x256xf32>
    %144 = arith.addf %142, %143 : vector<1x256xf32>
    %145 = arith.negf %144 : vector<1x256xf32>
    %146 = math.exp %145 : vector<1x256xf32>
    %cst_32 = arith.constant 1.000000e+00 : f32
    %147 = vector.broadcast %cst_32 : f32 to vector<1x256xf32>
    %148 = arith.addf %147, %146 : vector<1x256xf32>
    %149 = arith.divf %147, %148 : vector<1x256xf32>
    %150 = vector.extract_strided_slice %149 {offsets = [0, 0], sizes = [1, 128], strides = [1, 1]} : vector<1x256xf32> to vector<1x128xf32>
    %151 = vector.extract_strided_slice %149 {offsets = [0, 128], sizes = [1, 128], strides = [1, 1]} : vector<1x256xf32> to vector<1x128xf32>
    %152 = vector.extract_strided_slice %139 {offsets = [0, 256], sizes = [1, 128], strides = [1, 1]} : vector<1x384xf32> to vector<1x128xf32>
    %153 = vector.extract_strided_slice %141 {offsets = [0, 256], sizes = [1, 128], strides = [1, 1]} : vector<1x384xf32> to vector<1x128xf32>
    %154 = arith.mulf %150, %153 : vector<1x128xf32>
    %155 = arith.addf %152, %154 : vector<1x128xf32>
    %156 = math.tanh %155 : vector<1x128xf32>
    %cst_33 = arith.constant 1.000000e+00 : f32
    %157 = vector.broadcast %cst_33 : f32 to vector<1x128xf32>
    %158 = arith.subf %157, %151 : vector<1x128xf32>
    %159 = arith.mulf %158, %156 : vector<1x128xf32>
    %160 = arith.mulf %151, %132 : vector<1x128xf32>
    %161 = arith.addf %159, %160 : vector<1x128xf32>
    %162 = arith.addi %3, %c4_i32 : i32
    %c8_i32_34 = arith.constant 8 : i32
    %163 = arith.cmpi slt, %162, %c8_i32_34 : i32
    %164 = arith.select %163, %161, %132 : vector<1x128xf32>
    %165 = arith.index_cast %c4_i32 : i32 to index
    %c0_35 = arith.constant 0 : index
    %166 = vector.load %arg11[%165, %c0_35] : memref<8x128xf32, #tpu.memory_space<vmem>>, vector<1x128xf32>
    tpu.vector_store %arg11[%165, %c0_35], %164 {strides = array<i32>} : memref<8x128xf32, #tpu.memory_space<vmem>>, vector<1x128xf32>,
    %c5_i32 = arith.constant 5 : i32
    %167 = arith.addi %3, %c5_i32 : i32
    %168 = arith.index_cast %167 : i32 to index
    %169 = memref.load %arg1[%168] : memref<8xi32, #tpu.memory_space<smem>>
    %170 = arith.index_cast %169 : i32 to index
    %c0_36 = arith.constant 0 : index
    %171 = vector.load %arg2[%170, %c0_36] : memref<128x384xf32, #tpu.memory_space<vmem>>, vector<1x384xf32>
    %cst_37 = arith.constant dense<0.000000e+00> : vector<1x384xf32>
    %172 = tpu.matmul %164, %4, %cst_37 {dimension_numbers = #tpu.dot_dimension_numbers<[1], [0], [0], [1], [0, 0, 1, 1], [], []>} : vector<1x128xf32>, vector<128x384xf32>, vector<1x384xf32> -> vector<1x384xf32>
    %173 = arith.addf %172, %5 : vector<1x384xf32>
    %174 = vector.extract_strided_slice %171 {offsets = [0, 0], sizes = [1, 256], strides = [1, 1]} : vector<1x384xf32> to vector<1x256xf32>
    %175 = vector.extract_strided_slice %173 {offsets = [0, 0], sizes = [1, 256], strides = [1, 1]} : vector<1x384xf32> to vector<1x256xf32>
    %176 = arith.addf %174, %175 : vector<1x256xf32>
    %177 = arith.negf %176 : vector<1x256xf32>
    %178 = math.exp %177 : vector<1x256xf32>
    %cst_38 = arith.constant 1.000000e+00 : f32
    %179 = vector.broadcast %cst_38 : f32 to vector<1x256xf32>
    %180 = arith.addf %179, %178 : vector<1x256xf32>
    %181 = arith.divf %179, %180 : vector<1x256xf32>
    %182 = vector.extract_strided_slice %181 {offsets = [0, 0], sizes = [1, 128], strides = [1, 1]} : vector<1x256xf32> to vector<1x128xf32>
    %183 = vector.extract_strided_slice %181 {offsets = [0, 128], sizes = [1, 128], strides = [1, 1]} : vector<1x256xf32> to vector<1x128xf32>
    %184 = vector.extract_strided_slice %171 {offsets = [0, 256], sizes = [1, 128], strides = [1, 1]} : vector<1x384xf32> to vector<1x128xf32>
    %185 = vector.extract_strided_slice %173 {offsets = [0, 256], sizes = [1, 128], strides = [1, 1]} : vector<1x384xf32> to vector<1x128xf32>
    %186 = arith.mulf %182, %185 : vector<1x128xf32>
    %187 = arith.addf %184, %186 : vector<1x128xf32>
    %188 = math.tanh %187 : vector<1x128xf32>
    %cst_39 = arith.constant 1.000000e+00 : f32
    %189 = vector.broadcast %cst_39 : f32 to vector<1x128xf32>
    %190 = arith.subf %189, %183 : vector<1x128xf32>
    %191 = arith.mulf %190, %188 : vector<1x128xf32>
    %192 = arith.mulf %183, %164 : vector<1x128xf32>
    %193 = arith.addf %191, %192 : vector<1x128xf32>
    %194 = arith.addi %3, %c5_i32 : i32
    %c8_i32_40 = arith.constant 8 : i32
    %195 = arith.cmpi slt, %194, %c8_i32_40 : i32
    %196 = arith.select %195, %193, %164 : vector<1x128xf32>
    %197 = arith.index_cast %c5_i32 : i32 to index
    %c0_41 = arith.constant 0 : index
    %198 = vector.load %arg11[%197, %c0_41] : memref<8x128xf32, #tpu.memory_space<vmem>>, vector<1x128xf32>
    tpu.vector_store %arg11[%197, %c0_41], %196 {strides = array<i32>} : memref<8x128xf32, #tpu.memory_space<vmem>>, vector<1x128xf32>,
    %c6_i32 = arith.constant 6 : i32
    %199 = arith.addi %3, %c6_i32 : i32
    %200 = arith.index_cast %199 : i32 to index
    %201 = memref.load %arg1[%200] : memref<8xi32, #tpu.memory_space<smem>>
    %202 = arith.index_cast %201 : i32 to index
    %c0_42 = arith.constant 0 : index
    %203 = vector.load %arg2[%202, %c0_42] : memref<128x384xf32, #tpu.memory_space<vmem>>, vector<1x384xf32>
    %cst_43 = arith.constant dense<0.000000e+00> : vector<1x384xf32>
    %204 = tpu.matmul %196, %4, %cst_43 {dimension_numbers = #tpu.dot_dimension_numbers<[1], [0], [0], [1], [0, 0, 1, 1], [], []>} : vector<1x128xf32>, vector<128x384xf32>, vector<1x384xf32> -> vector<1x384xf32>
    %205 = arith.addf %204, %5 : vector<1x384xf32>
    %206 = vector.extract_strided_slice %203 {offsets = [0, 0], sizes = [1, 256], strides = [1, 1]} : vector<1x384xf32> to vector<1x256xf32>
    %207 = vector.extract_strided_slice %205 {offsets = [0, 0], sizes = [1, 256], strides = [1, 1]} : vector<1x384xf32> to vector<1x256xf32>
    %208 = arith.addf %206, %207 : vector<1x256xf32>
    %209 = arith.negf %208 : vector<1x256xf32>
    %210 = math.exp %209 : vector<1x256xf32>
    %cst_44 = arith.constant 1.000000e+00 : f32
    %211 = vector.broadcast %cst_44 : f32 to vector<1x256xf32>
    %212 = arith.addf %211, %210 : vector<1x256xf32>
    %213 = arith.divf %211, %212 : vector<1x256xf32>
    %214 = vector.extract_strided_slice %213 {offsets = [0, 0], sizes = [1, 128], strides = [1, 1]} : vector<1x256xf32> to vector<1x128xf32>
    %215 = vector.extract_strided_slice %213 {offsets = [0, 128], sizes = [1, 128], strides = [1, 1]} : vector<1x256xf32> to vector<1x128xf32>
    %216 = vector.extract_strided_slice %203 {offsets = [0, 256], sizes = [1, 128], strides = [1, 1]} : vector<1x384xf32> to vector<1x128xf32>
    %217 = vector.extract_strided_slice %205 {offsets = [0, 256], sizes = [1, 128], strides = [1, 1]} : vector<1x384xf32> to vector<1x128xf32>
    %218 = arith.mulf %214, %217 : vector<1x128xf32>
    %219 = arith.addf %216, %218 : vector<1x128xf32>
    %220 = math.tanh %219 : vector<1x128xf32>
    %cst_45 = arith.constant 1.000000e+00 : f32
    %221 = vector.broadcast %cst_45 : f32 to vector<1x128xf32>
    %222 = arith.subf %221, %215 : vector<1x128xf32>
    %223 = arith.mulf %222, %220 : vector<1x128xf32>
    %224 = arith.mulf %215, %196 : vector<1x128xf32>
    %225 = arith.addf %223, %224 : vector<1x128xf32>
    %226 = arith.addi %3, %c6_i32 : i32
    %c8_i32_46 = arith.constant 8 : i32
    %227 = arith.cmpi slt, %226, %c8_i32_46 : i32
    %228 = arith.select %227, %225, %196 : vector<1x128xf32>
    %229 = arith.index_cast %c6_i32 : i32 to index
    %c0_47 = arith.constant 0 : index
    %230 = vector.load %arg11[%229, %c0_47] : memref<8x128xf32, #tpu.memory_space<vmem>>, vector<1x128xf32>
    tpu.vector_store %arg11[%229, %c0_47], %228 {strides = array<i32>} : memref<8x128xf32, #tpu.memory_space<vmem>>, vector<1x128xf32>,
    %c7_i32 = arith.constant 7 : i32
    %231 = arith.addi %3, %c7_i32 : i32
    %232 = arith.index_cast %231 : i32 to index
    %233 = memref.load %arg1[%232] : memref<8xi32, #tpu.memory_space<smem>>
    %234 = arith.index_cast %233 : i32 to index
    %c0_48 = arith.constant 0 : index
    %235 = vector.load %arg2[%234, %c0_48] : memref<128x384xf32, #tpu.memory_space<vmem>>, vector<1x384xf32>
    %cst_49 = arith.constant dense<0.000000e+00> : vector<1x384xf32>
    %236 = tpu.matmul %228, %4, %cst_49 {dimension_numbers = #tpu.dot_dimension_numbers<[1], [0], [0], [1], [0, 0, 1, 1], [], []>} : vector<1x128xf32>, vector<128x384xf32>, vector<1x384xf32> -> vector<1x384xf32>
    %237 = arith.addf %236, %5 : vector<1x384xf32>
    %238 = vector.extract_strided_slice %235 {offsets = [0, 0], sizes = [1, 256], strides = [1, 1]} : vector<1x384xf32> to vector<1x256xf32>
    %239 = vector.extract_strided_slice %237 {offsets = [0, 0], sizes = [1, 256], strides = [1, 1]} : vector<1x384xf32> to vector<1x256xf32>
    %240 = arith.addf %238, %239 : vector<1x256xf32>
    %241 = arith.negf %240 : vector<1x256xf32>
    %242 = math.exp %241 : vector<1x256xf32>
    %cst_50 = arith.constant 1.000000e+00 : f32
    %243 = vector.broadcast %cst_50 : f32 to vector<1x256xf32>
    %244 = arith.addf %243, %242 : vector<1x256xf32>
    %245 = arith.divf %243, %244 : vector<1x256xf32>
    %246 = vector.extract_strided_slice %245 {offsets = [0, 0], sizes = [1, 128], strides = [1, 1]} : vector<1x256xf32> to vector<1x128xf32>
    %247 = vector.extract_strided_slice %245 {offsets = [0, 128], sizes = [1, 128], strides = [1, 1]} : vector<1x256xf32> to vector<1x128xf32>
    %248 = vector.extract_strided_slice %235 {offsets = [0, 256], sizes = [1, 128], strides = [1, 1]} : vector<1x384xf32> to vector<1x128xf32>
    %249 = vector.extract_strided_slice %237 {offsets = [0, 256], sizes = [1, 128], strides = [1, 1]} : vector<1x384xf32> to vector<1x128xf32>
    %250 = arith.mulf %246, %249 : vector<1x128xf32>
    %251 = arith.addf %248, %250 : vector<1x128xf32>
    %252 = math.tanh %251 : vector<1x128xf32>
    %cst_51 = arith.constant 1.000000e+00 : f32
    %253 = vector.broadcast %cst_51 : f32 to vector<1x128xf32>
    %254 = arith.subf %253, %247 : vector<1x128xf32>
    %255 = arith.mulf %254, %252 : vector<1x128xf32>
    %256 = arith.mulf %247, %228 : vector<1x128xf32>
    %257 = arith.addf %255, %256 : vector<1x128xf32>
    %258 = arith.addi %3, %c7_i32 : i32
    %c8_i32_52 = arith.constant 8 : i32
    %259 = arith.cmpi slt, %258, %c8_i32_52 : i32
    %260 = arith.select %259, %257, %228 : vector<1x128xf32>
    %261 = arith.index_cast %c7_i32 : i32 to index
    %c0_53 = arith.constant 0 : index
    %262 = vector.load %arg11[%261, %c0_53] : memref<8x128xf32, #tpu.memory_space<vmem>>, vector<1x128xf32>
    tpu.vector_store %arg11[%261, %c0_53], %260 {strides = array<i32>} : memref<8x128xf32, #tpu.memory_space<vmem>>, vector<1x128xf32>,
    %c8_i32_54 = arith.constant 8 : i32
    %c0_55 = arith.constant 0 : index
    %c0_56 = arith.constant 0 : index
    %263 = vector.load %arg10[%c0_55, %c0_56] : memref<1x128xf32, #tpu.memory_space<vmem>>, vector<1x128xf32>
    tpu.vector_store %arg10[%c0_55, %c0_56], %260 {strides = array<i32>} : memref<1x128xf32, #tpu.memory_space<vmem>>, vector<1x128xf32>,
    %c0_57 = arith.constant 0 : index
    %c0_58 = arith.constant 0 : index
    %264 = vector.load %arg9[%c0_57, %c0_58] : memref<1x128xf32, #tpu.memory_space<vmem>>, vector<1x128xf32>
    tpu.vector_store %arg9[%c0_57, %c0_58], %260 {strides = array<i32>} : memref<1x128xf32, #tpu.memory_space<vmem>>, vector<1x128xf32>,
    %c0_59 = arith.constant 0 : index
    %c0_60 = arith.constant 0 : index
    %265 = vector.load %arg11[%c0_59, %c0_60] : memref<8x128xf32, #tpu.memory_space<vmem>>, vector<8x128xf32>
    %c0_61 = arith.constant 0 : index
    %c0_62 = arith.constant 0 : index
    %266 = vector.load %arg5[%c0_61, %c0_62] : memref<128x128xf32, #tpu.memory_space<vmem>>, vector<128x128xf32>
    %cst_63 = arith.constant dense<0.000000e+00> : vector<8x128xf32>
    %267 = tpu.matmul %265, %266, %cst_63 {dimension_numbers = #tpu.dot_dimension_numbers<[1], [0], [0], [1], [0, 0, 1, 1], [], []>} : vector<8x128xf32>, vector<128x128xf32>, vector<8x128xf32> -> vector<8x128xf32>
    %c0_64 = arith.constant 0 : index
    %c0_65 = arith.constant 0 : index
    %268 = vector.load %arg6[%c0_64, %c0_65] : memref<1x128xf32, #tpu.memory_space<vmem>>, vector<1x128xf32>
    %269 = vector.broadcast %268 : vector<1x128xf32> to vector<8x128xf32>
    %270 = arith.addf %267, %269 : vector<8x128xf32>
    %c0_66 = arith.constant 0 : index
    %c0_67 = arith.constant 0 : index
    %271 = vector.load %arg8[%c0_66, %c0_67] : memref<8x128xf32, #tpu.memory_space<vmem>>, vector<8x128xf32>
    tpu.vector_store %arg8[%c0_66, %c0_67], %270 {strides = array<i32>} : memref<8x128xf32, #tpu.memory_space<vmem>>, vector<8x128xf32>,
    return
  }
  func.func @transform_0(%arg0: i32, %arg1: memref<8xi32, #tpu.memory_space<smem>>) -> (i32, i32) {
    %c0_i32 = arith.constant 0 : i32
    %c0_i32_0 = arith.constant 0 : i32
    %c0_i32_1 = arith.constant 0 : i32
    return %c0_i32, %c0_i32_0 : i32, i32
  }
  func.func @transform_1(%arg0: i32, %arg1: memref<8xi32, #tpu.memory_space<smem>>) -> (i32, i32) {
    %c0_i32 = arith.constant 0 : i32
    %c0_i32_0 = arith.constant 0 : i32
    %c0_i32_1 = arith.constant 0 : i32
    return %c0_i32, %c0_i32_0 : i32, i32
  }
  func.func @transform_2(%arg0: i32, %arg1: memref<8xi32, #tpu.memory_space<smem>>) -> (i32, i32) {
    %c0_i32 = arith.constant 0 : i32
    %c0_i32_0 = arith.constant 0 : i32
    %c0_i32_1 = arith.constant 0 : i32
    return %c0_i32, %c0_i32_0 : i32, i32
  }
  func.func @transform_3(%arg0: i32, %arg1: memref<8xi32, #tpu.memory_space<smem>>) -> (i32, i32) {
    %c0_i32 = arith.constant 0 : i32
    %c0_i32_0 = arith.constant 0 : i32
    %c0_i32_1 = arith.constant 0 : i32
    return %c0_i32, %c0_i32_0 : i32, i32
  }
  func.func @transform_4(%arg0: i32, %arg1: memref<8xi32, #tpu.memory_space<smem>>) -> (i32, i32) {
    %c0_i32 = arith.constant 0 : i32
    %c0_i32_0 = arith.constant 0 : i32
    %c0_i32_1 = arith.constant 0 : i32
    return %c0_i32, %c0_i32_0 : i32, i32
  }
  func.func @transform_5(%arg0: i32, %arg1: memref<8xi32, #tpu.memory_space<smem>>) -> (i32, i32) {
    %c0_i32 = arith.constant 0 : i32
    %c0_i32_0 = arith.constant 0 : i32
    %c0_i32_1 = arith.constant 0 : i32
    return %c0_i32, %c0_i32_0 : i32, i32
  }
  func.func @transform_6(%arg0: i32, %arg1: memref<8xi32, #tpu.memory_space<smem>>) -> (i32, i32) {
    %c0_i32 = arith.constant 0 : i32
    %c0_i32_0 = arith.constant 0 : i32
    return %arg0, %c0_i32 : i32, i32
  }
  func.func @transform_7(%arg0: i32, %arg1: memref<8xi32, #tpu.memory_space<smem>>) -> (i32, i32) {
    %c0_i32 = arith.constant 0 : i32
    %c0_i32_0 = arith.constant 0 : i32
    %c0_i32_1 = arith.constant 0 : i32
    return %c0_i32, %c0_i32_0 : i32, i32
  }
}

</mosaic_0001>

<llo_original>
// kernel: rnn_forward_sequence.1
$region0: #{rnn_forward_sequence.1}
  #allocation0 [shape = 'u32[]', space=smem, size = 0x4, offset = 0x4, fixed_abs, tag = 'smem constant byte address 0x4 - core index']
  #allocation1 [shape = 'u32[144,128]{1,0:T(1,128)}', space=vmem, size = 0x12000, scoped, tag = 'internal scratch']
  #allocation2 [shape = 'f32[1,128]{1,0:T(1,128)}', space=vmem, size = 0x200, scoped, tag = 'scratch operand']
  #allocation3 [shape = 'f32[8,128]{1,0:T(8,128)}', space=vmem, size = 0x1000, scoped, tag = 'scratch operand']
  #allocation4 [shape = 's32[1]{0}', space=sflag, size = 0x4, scoped, tag = 'scoped memory for rnn_forward_sequence.1']
  #allocation5 [shape = 'u8[512]{0}', space=smem, size = 0x200, scoped, tag = 'prefetched SMEM operand 0']
  %s0 = inlined_call_operand.vmem [shape: s32[8], index: 0, kind: input, shape index: {}]
  %s1 = inlined_call_operand.hbm [shape: f32[128,384], index: 1, kind: input, shape index: {}]
  %s2 = inlined_call_operand.hbm [shape: f32[128,384], index: 2, kind: input, shape index: {}]
  %s3 = inlined_call_operand.vmem [shape: f32[1,384], index: 3, kind: input, shape index: {}]
  %s4 = inlined_call_operand.hbm [shape: f32[128,128], index: 4, kind: input, shape index: {}]
  %s5 = inlined_call_operand.vmem [shape: f32[1,128], index: 5, kind: input, shape index: {}]
  %s6 = inlined_call_operand.vmem [shape: f32[1,128], index: 6, kind: input, shape index: {}]
  %s7 = inlined_call_operand.hbm [shape: f32[8,128], index: 7, kind: output, shape index: {0}]
  %s8 = inlined_call_operand.vmem [shape: f32[1,128], index: 8, kind: output, shape index: {1}]
  %9 = xla_tuple %s7, %s8
  %s10 = sld [smem:[#allocation0]]
  $region58: #{rnn_forward_sequence.1} parent=0
    _
  %s12 = ssub.s32 1, %s10
  %s13 = scalar_select 0, %s12, %s10
  %s14 = sshll.u32 %s0, 4
  %s15 = int_to_ptr.vmem [resolvable:$true] %s14
  %17 = dma.vmem_to_smem %s15, 16, [#allocation5], [#allocation4]
  %18 = dma.done [#allocation4], 16
  %19 = sfence
  $region1: #{rnn_forward_sequence.1} parent=0
    #allocation6 [shape = 'u8[196608]{0}', space=vmem, size = 0x30000, scoped, tag = 'input window, operand 1, single buffered']
    #allocation7 [shape = 's32[1]{0}', space=sflag, size = 0x4, scoped, tag = 'scoped memory for rnn_forward_sequence.1']
    #allocation8 [shape = 's32[1]{0}', space=sflag, size = 0x4, scoped, tag = 'scoped memory for rnn_forward_sequence.1']
    #allocation9 [shape = 'u8[196608]{0}', space=vmem, size = 0x30000, scoped, tag = 'input window, operand 2, single buffered']
    #allocation10 [shape = 's32[1]{0}', space=sflag, size = 0x4, scoped, tag = 'scoped memory for rnn_forward_sequence.1']
    #allocation11 [shape = 'u8[65536]{0}', space=vmem, size = 0x10000, scoped, tag = 'input window, operand 4, single buffered']
    #allocation12 [shape = 'u8[4096]{0}', space=vmem, size = 0x1000, scoped, tag = 'output window, operand 0, single buffered']
    %20 = vsyncpa [#allocation7], 0
    %21 = vsyncpa [#allocation10], 0
    %22 = vsyncpa [#allocation8], 0
    // Predicated region
    $region2: #{rnn_forward_sequence.1} parent=1 // pred_check
      _
    $region3: #{rnn_forward_sequence.1} parent=1 // pred_check_branch
      %24 = sbr.rel (0) target = $region5
    $region4: #{rnn_forward_sequence.1} parent=1 // pred_region
      %s26 = ssub.s32 6144, 6144
      %27 = vsyncadd [#allocation7], %s26
      %s28 = sshll.u32 [#allocation6], 4
      %s29 = int_to_ptr.vmem [resolvable:$true] %s28
      %34 = dma.hbm_to_vmem [thread:$0]  %s1, 6144, %s29, [#allocation7], 384, 384, 24
    $region5: #{rnn_forward_sequence.1} parent=1 // pred_fallthru
      _
    // Predicated region
    $region6: #{rnn_forward_sequence.1} parent=1 // pred_check
      _
    $region7: #{rnn_forward_sequence.1} parent=1 // pred_check_branch
      %36 = sbr.rel (0) target = $region9
    $region8: #{rnn_forward_sequence.1} parent=1 // pred_region
      %s38 = ssub.s32 6144, 6144
      %39 = vsyncadd [#allocation10], %s38
      %s40 = sshll.u32 [#allocation9], 4
      %s41 = int_to_ptr.vmem [resolvable:$true] %s40
      %46 = dma.hbm_to_vmem [thread:$0]  %s2, 6144, %s41, [#allocation10], 384, 384, 24
    $region9: #{rnn_forward_sequence.1} parent=1 // pred_fallthru
      _
    // Predicated region
    $region10: #{rnn_forward_sequence.1} parent=1 // pred_check
      _
    $region11: #{rnn_forward_sequence.1} parent=1 // pred_check_branch
      %48 = sbr.rel (0) target = $region13
    $region12: #{rnn_forward_sequence.1} parent=1 // pred_region
      _
    $region13: #{rnn_forward_sequence.1} parent=1 // pred_fallthru
      _
    // Predicated region
    $region14: #{rnn_forward_sequence.1} parent=1 // pred_check
      _
    $region15: #{rnn_forward_sequence.1} parent=1 // pred_check_branch
      %50 = sbr.rel (0) target = $region17
    $region16: #{rnn_forward_sequence.1} parent=1 // pred_region
      %s52 = ssub.s32 2048, 2048
      %53 = vsyncadd [#allocation10], %s52
      %s54 = sshll.u32 [#allocation11], 4
      %s55 = int_to_ptr.vmem [resolvable:$true] %s54
      %60 = dma.hbm_to_vmem [thread:$0]  %s4, 2048, %s55, [#allocation10], 128, 128, 8
    $region17: #{rnn_forward_sequence.1} parent=1 // pred_fallthru
      _
    // Predicated region
    $region18: #{rnn_forward_sequence.1} parent=1 // pred_check
      _
    $region19: #{rnn_forward_sequence.1} parent=1 // pred_check_branch
      %62 = sbr.rel (0) target = $region21
    $region20: #{rnn_forward_sequence.1} parent=1 // pred_region
      _
    $region21: #{rnn_forward_sequence.1} parent=1 // pred_fallthru
      _
    // Predicated region
    $region22: #{rnn_forward_sequence.1} parent=1 // pred_check
      _
    $region23: #{rnn_forward_sequence.1} parent=1 // pred_check_branch
      %64 = sbr.rel (0) target = $region25
    $region24: #{rnn_forward_sequence.1} parent=1 // pred_region
      _
    $region25: #{rnn_forward_sequence.1} parent=1 // pred_fallthru
      _
    // Predicated region
    $region26: #{rnn_forward_sequence.1} parent=1 // pred_check
      _
    $region27: #{rnn_forward_sequence.1} parent=1 // pred_check_branch
      %66 = sbr.rel (0) target = $region29
    $region28: #{rnn_forward_sequence.1} parent=1 // pred_region
      %67 = dma.done [#allocation7], 6144
    $region29: #{rnn_forward_sequence.1} parent=1 // pred_fallthru
      _
    // Predicated region
    $region30: #{rnn_forward_sequence.1} parent=1 // pred_check
      _
    $region31: #{rnn_forward_sequence.1} parent=1 // pred_check_branch
      %69 = sbr.rel (0) target = $region33
    $region32: #{rnn_forward_sequence.1} parent=1 // pred_region
      %70 = dma.done [#allocation10], 6144
    $region33: #{rnn_forward_sequence.1} parent=1 // pred_fallthru
      _
    // Predicated region
    $region34: #{rnn_forward_sequence.1} parent=1 // pred_check
      _
    $region35: #{rnn_forward_sequence.1} parent=1 // pred_check_branch
      %72 = sbr.rel (0) target = $region37
    $region36: #{rnn_forward_sequence.1} parent=1 // pred_region
      %73 = dma.done [#allocation10], 2048
    $region37: #{rnn_forward_sequence.1} parent=1 // pred_fallthru
      _
    %p74 = scmp.eq.s32.totalorder 0, 0
    // Predicated region
    $region38: #{rnn_forward_sequence.1} parent=1 // pred_check
      %p75 = pneg %p74
    $region39: #{rnn_forward_sequence.1} parent=1 // pred_check_branch
      %77 = sbr.rel (%p75) target = $region41
    $region40: #{rnn_forward_sequence.1} parent=1 // pred_region
      %v78 = vld [vmem:[%s6] sm:$0x1]
      %79 = vst [vmem:[#allocation2] sm:$0x1] %v78
    $region41: #{rnn_forward_sequence.1} parent=1 // pred_fallthru
      _
    %s80 = smul.u32 0, 8
    %v81 = vld [vmem:[#allocation9] sm:$0xff]
    %v82 = vld [vmem:[#allocation9 + $0x8] sm:$0xff]
    %v83 = vld [vmem:[#allocation9 + $0x10] sm:$0xff]
    %v84 = vld [vmem:[#allocation9 + $0x18] sm:$0xff]
    %v85 = vld [vmem:[#allocation9 + $0x20] sm:$0xff]
    %v86 = vld [vmem:[#allocation9 + $0x28] sm:$0xff]
    %v87 = vld [vmem:[#allocation9 + $0x30] sm:$0xff]
    %v88 = vld [vmem:[#allocation9 + $0x38] sm:$0xff]
    %v89 = vld [vmem:[#allocation9 + $0x40] sm:$0xff]
    %v90 = vld [vmem:[#allocation9 + $0x48] sm:$0xff]
    %v91 = vld [vmem:[#allocation9 + $0x50] sm:$0xff]
    %v92 = vld [vmem:[#allocation9 + $0x58] sm:$0xff]
    %v93 = vld [vmem:[#allocation9 + $0x60] sm:$0xff]
    %v94 = vld [vmem:[#allocation9 + $0x68] sm:$0xff]
    %v95 = vld [vmem:[#allocation9 + $0x70] sm:$0xff]
    %v96 = vld [vmem:[#allocation9 + $0x78] sm:$0xff]
    %v97 = vld [vmem:[#allocation9 + $0x80] sm:$0xff]
    %v98 = vld [vmem:[#allocation9 + $0x88] sm:$0xff]
    %v99 = vld [vmem:[#allocation9 + $0x90] sm:$0xff]
    %v100 = vld [vmem:[#allocation9 + $0x98] sm:$0xff]
    %v101 = vld [vmem:[#allocation9 + $0xa0] sm:$0xff]
    %v102 = vld [vmem:[#allocation9 + $0xa8] sm:$0xff]
    %v103 = vld [vmem:[#allocation9 + $0xb0] sm:$0xff]
    %v104 = vld [vmem:[#allocation9 + $0xb8] sm:$0xff]
    %v105 = vld [vmem:[#allocation9 + $0xc0] sm:$0xff]
    %v106 = vld [vmem:[#allocation9 + $0xc8] sm:$0xff]
    %v107 = vld [vmem:[#allocation9 + $0xd0] sm:$0xff]
    %v108 = vld [vmem:[#allocation9 + $0xd8] sm:$0xff]
    %v109 = vld [vmem:[#allocation9 + $0xe0] sm:$0xff]
    %v110 = vld [vmem:[#allocation9 + $0xe8] sm:$0xff]
    %v111 = vld [vmem:[#allocation9 + $0xf0] sm:$0xff]
    %v112 = vld [vmem:[#allocation9 + $0xf8] sm:$0xff]
    %v113 = vld [vmem:[#allocation9 + $0x100] sm:$0xff]
    %v114 = vld [vmem:[#allocation9 + $0x108] sm:$0xff]
    %v115 = vld [vmem:[#allocation9 + $0x110] sm:$0xff]
    %v116 = vld [vmem:[#allocation9 + $0x118] sm:$0xff]
    %v117 = vld [vmem:[#allocation9 + $0x120] sm:$0xff]
    %v118 = vld [vmem:[#allocation9 + $0x128] sm:$0xff]
    %v119 = vld [vmem:[#allocation9 + $0x130] sm:$0xff]
    %v120 = vld [vmem:[#allocation9 + $0x138] sm:$0xff]
    %v121 = vld [vmem:[#allocation9 + $0x140] sm:$0xff]
    %v122 = vld [vmem:[#allocation9 + $0x148] sm:$0xff]
    %v123 = vld [vmem:[#allocation9 + $0x150] sm:$0xff]
    %v124 = vld [vmem:[#allocation9 + $0x158] sm:$0xff]
    %v125 = vld [vmem:[#allocation9 + $0x160] sm:$0xff]
    %v126 = vld [vmem:[#allocation9 + $0x168] sm:$0xff]
    %v127 = vld [vmem:[#allocation9 + $0x170] sm:$0xff]
    %v128 = vld [vmem:[#allocation9 + $0x178] sm:$0xff]
    %v129 = vld [vmem:[%s3] sm:$0x7]
    %v130 = vld [vmem:[#allocation2] sm:$0x1]
    %s131 = sld [smem:[#allocation5 + %s80]]
    %s132 = sshra.s32 %s131, 3
    %s133 = sand.u32 %s131, 7
    %s134 = sshra.s32 %s131, 3
    %s135 = sand.u32 %s131, 7
    %s136 = smul.u32 %s132, 3
    %s137 = smul.u32 %s136, 8
    %s138 = sadd.s32 %s137, %s135
    %s139 = scalar_lea.vmem [#allocation6], %s138
    %v140 = vld [vmem:[%s139] ss:$8 sm:$0x7]
    %v142 = vlaneseq
    %v143 = vshrl.u32 %v142, 7
    %v144 = vsub.s32 0, %v143
    %v145 = vrot.slane %v129, %v144
    %v146 = vlaneseq
    %v147 = vshrl.u32 %v146, 7
    %v148 = vsub.s32 1, %v147
    %v149 = vrot.slane %v129, %v148
    %v150 = vlaneseq
    %v151 = vshrl.u32 %v150, 7
    %v152 = vsub.s32 2, %v151
    %v153 = vrot.slane %v129, %v152
    %157 = vmatprep.subr.mxu0 %v127
    %158 = vmatpush1.msra.mxu0 %v126
    %159 = vmatprep.subr.mxu0 %v124
    %160 = vmatpush1.msra.mxu0 %v123
    %161 = vmatprep.subr.mxu0 %v121
    %162 = vmatpush1.msra.mxu0 %v120
    %163 = vmatprep.subr.mxu0 %v118
    %164 = vmatpush1.msra.mxu0 %v117
    %165 = vmatprep.subr.mxu0 %v115
    %166 = vmatpush1.msra.mxu0 %v114
    %167 = vmatprep.subr.mxu0 %v112
    %168 = vmatpush1.msra.mxu0 %v111
    %169 = vmatprep.subr.mxu0 %v109
    %170 = vmatpush1.msra.mxu0 %v108
    %171 = vmatprep.subr.mxu0 %v106
    %172 = vmatpush1.msra.mxu0 %v105
    %173 = vmatprep.subr.mxu0 %v103
    %174 = vmatpush1.msra.mxu0 %v102
    %175 = vmatprep.subr.mxu0 %v100
    %176 = vmatpush1.msra.mxu0 %v99
    %177 = vmatprep.subr.mxu0 %v97
    %178 = vmatpush1.msra.mxu0 %v96
    %179 = vmatprep.subr.mxu0 %v94
    %180 = vmatpush1.msra.mxu0 %v93
    %181 = vmatprep.subr.mxu0 %v91
    %182 = vmatpush1.msra.mxu0 %v90
    %183 = vmatprep.subr.mxu0 %v88
    %184 = vmatpush1.msra.mxu0 %v87
    %185 = vmatprep.subr.mxu0 %v85
    %186 = vmatpush1.msra.mxu0 %v84
    %187 = vmatprep.subr.mxu0 %v82
    %188 = vmatpush1.msra.mxu0 %v81
    %189 = vmatprep.subr.mxu0 0.0
    %190 = vmatpush2.msra.mxu0 0.0
    %191 = vmatprep.subr.mxu0 0.0
    %192 = vmatpush2.msra.mxu0 0.0
    %193 = vmatprep.subr.mxu0 0.0
    %194 = vmatpush2.msra.mxu0 0.0
    %195 = vmatprep.subr.mxu0 0.0
    %196 = vmatpush2.msra.mxu0 0.0
    %197 = vmatprep.subr.mxu0 0.0
    %198 = vmatpush2.msra.mxu0 0.0
    %199 = vmatprep.subr.mxu0 0.0
    %200 = vmatpush2.msra.mxu0 0.0
    %201 = vmatprep.subr.mxu0 0.0
    %202 = vmatpush2.msra.mxu0 0.0
    %203 = vmatprep.subr.mxu0 0.0
    %204 = vmatpush2.msra.mxu0 0.0
    %205 = vmatprep.subr.mxu0 0.0
    %206 = vmatpush2.msra.mxu0 0.0
    %207 = vmatprep.subr.mxu0 0.0
    %208 = vmatpush2.msra.mxu0 0.0
    %209 = vmatprep.subr.mxu0 0.0
    %210 = vmatpush2.msra.mxu0 0.0
    %211 = vmatprep.subr.mxu0 0.0
    %212 = vmatpush2.msra.mxu0 0.0
    %213 = vmatprep.subr.mxu0 0.0
    %214 = vmatpush2.msra.mxu0 0.0
    %215 = vmatprep.subr.mxu0 0.0
    %216 = vmatpush2.msra.mxu0 0.0
    %217 = vmatprep.subr.mxu0 0.0
    %218 = vmatpush2.msra.mxu0 0.0
    %219 = vmatprep.subr.mxu0 0.0
    %220 = vmatpush2.msra.mxu0 0.0
    %221 = vmatprep.mubr.f32.mxu0 0.0
    %222 = vmatmul.mubr.f32.gmra.mxu0 %v130
    %v223 = vpop.f32.mrf.mxu0
    %v224 = vadd.f32 %v145, %v223
    %v225 = vpop.f32.mrf.mxu0
    %v226 = vadd.f32 %v149, %v225
    %227 = vdwg.mxu0
    %228 = vmatprep.subr.mxu0 0.0
    %229 = vmatpush1.msra.mxu0 %v128
    %230 = vmatprep.subr.mxu0 0.0
    %231 = vmatpush1.msra.mxu0 %v125
    %232 = vmatprep.subr.mxu0 0.0
    %233 = vmatpush1.msra.mxu0 %v122
    %234 = vmatprep.subr.mxu0 0.0
    %235 = vmatpush1.msra.mxu0 %v119
    %236 = vmatprep.subr.mxu0 0.0
    %237 = vmatpush1.msra.mxu0 %v116
    %238 = vmatprep.subr.mxu0 0.0
    %239 = vmatpush1.msra.mxu0 %v113
    %240 = vmatprep.subr.mxu0 0.0
    %241 = vmatpush1.msra.mxu0 %v110
    %242 = vmatprep.subr.mxu0 0.0
    %243 = vmatpush1.msra.mxu0 %v107
    %244 = vmatprep.subr.mxu0 0.0
    %245 = vmatpush1.msra.mxu0 %v104
    %246 = vmatprep.subr.mxu0 0.0
    %247 = vmatpush1.msra.mxu0 %v101
    %248 = vmatprep.subr.mxu0 0.0
    %249 = vmatpush1.msra.mxu0 %v98
    %250 = vmatprep.subr.mxu0 0.0
    %251 = vmatpush1.msra.mxu0 %v95
    %252 = vmatprep.subr.mxu0 0.0
    %253 = vmatpush1.msra.mxu0 %v92
    %254 = vmatprep.subr.mxu0 0.0
    %255 = vmatpush1.msra.mxu0 %v89
    %256 = vmatprep.subr.mxu0 0.0
    %257 = vmatpush1.msra.mxu0 %v86
    %258 = vmatprep.subr.mxu0 0.0
    %259 = vmatpush1.msra.mxu0 %v83
    %260 = vmatprep.subr.mxu0 0.0
    %261 = vmatpush2.msra.mxu0 0.0
    %262 = vmatprep.subr.mxu0 0.0
    %263 = vmatpush2.msra.mxu0 0.0
    %264 = vmatprep.subr.mxu0 0.0
    %265 = vmatpush2.msra.mxu0 0.0
    %266 = vmatprep.subr.mxu0 0.0
    %267 = vmatpush2.msra.mxu0 0.0
    %268 = vmatprep.subr.mxu0 0.0
    %269 = vmatpush2.msra.mxu0 0.0
    %270 = vmatprep.subr.mxu0 0.0
    %271 = vmatpush2.msra.mxu0 0.0
    %272 = vmatprep.subr.mxu0 0.0
    %273 = vmatpush2.msra.mxu0 0.0
    %274 = vmatprep.subr.mxu0 0.0
    %275 = vmatpush2.msra.mxu0 0.0
    %276 = vmatprep.subr.mxu0 0.0
    %277 = vmatpush2.msra.mxu0 0.0
    %278 = vmatprep.subr.mxu0 0.0
    %279 = vmatpush2.msra.mxu0 0.0
    %280 = vmatprep.subr.mxu0 0.0
    %281 = vmatpush2.msra.mxu0 0.0
    %282 = vmatprep.subr.mxu0 0.0
    %283 = vmatpush2.msra.mxu0 0.0
    %284 = vmatprep.subr.mxu0 0.0
    %285 = vmatpush2.msra.mxu0 0.0
    %286 = vmatprep.subr.mxu0 0.0
    %287 = vmatpush2.msra.mxu0 0.0
    %288 = vmatprep.subr.mxu0 0.0
    %289 = vmatpush2.msra.mxu0 0.0
    %290 = vmatprep.subr.mxu0 0.0
    %291 = vmatpush2.msra.mxu0 0.0
    %292 = vmatprep.mubr.f32.mxu0 0.0
    %293 = vmatmul.mubr.f32.gmra.mxu0 %v130
    %v294 = vpop.f32.mrf.mxu0
    %v295 = vadd.f32 %v153, %v294
    %v296 = vpop.f32.mrf.mxu0
    %297 = vdwg.mxu0
    %v300 = vcombine.low %v224, %v226
    %v302 = vunpack.c.l.s4 1966171168
    %v303 = vunpack.c.0.s8 %v302
    %v304 = vlaneseq
    %v305 = vshrl.u32 %v304, 7
    %v306 = vsub.s32 %v303, %v305
    %v307 = vrot.slane %v300, %v306
    %v309 = vunpack.c.l.s4 1966171168
    %v310 = vunpack.c.0.s8 %v309
    %v311 = vlaneseq
    %v312 = vshrl.u32 %v311, 7
    %v313 = vsub.s32 %v310, %v312
    %v314 = vrot.slane %v307, %v313
    %v316 = vadd.f32 %v140, %v314
    %v317 = vxor.u32 %v316, 2147483648
    %v318 = vmul.f32 %v317, 1.442695
    %v319 = vpow.pop %v318
    %v320 = vadd.f32 %v319, 1.0
    %v321 = vrcp.pop %v320
    %v322 = vmul.f32 1.0, %v321
    %v323 = vmul.f32 %v322, %v295
    %v325 = vrot.slane %v140, 2
    %v327 = vadd.f32 %v325, %v323
    %v328 = vtanh.pop %v327
    %v330 = vrot.slane %v322, 1
    %v332 = vsub.f32 1.0, %v330
    %v333 = vmul.f32 %v332, %v328
    %v334 = vmul.f32 %v330, %v130
    %v335 = vadd.f32 %v333, %v334
    %p336 = scmp.lt.s32.totalorder %s80, 8
    %s337 = scalar_select %p336, 1, 0
    %v338 = vstv %s337
    %vm339 = vcmp.eq.s32.totalorder %v338, 1
    %v340 = vsel %vm339, %v335, %v130
    %341 = vst [vmem:[#allocation3] sm:$0x1] %v340
    %s342 = sadd.s32 %s80, 1
    %s343 = sld [smem:[#allocation5 + %s342]]
    %s344 = sshra.s32 %s343, 3
    %s345 = sand.u32 %s343, 7
    %s346 = sshra.s32 %s343, 3
    %s347 = sand.u32 %s343, 7
    %s348 = smul.u32 %s344, 3
    %s349 = smul.u32 %s348, 8
    %s350 = sadd.s32 %s349, %s347
    %s351 = scalar_lea.vmem [#allocation6], %s350
    %v352 = vld [vmem:[%s351] ss:$8 sm:$0x7]
    %353 = vmatprep.subr.mxu0 %v127
    %354 = vmatpush1.msra.mxu0 %v126
    %355 = vmatprep.subr.mxu0 %v124
    %356 = vmatpush1.msra.mxu0 %v123
    %357 = vmatprep.subr.mxu0 %v121
    %358 = vmatpush1.msra.mxu0 %v120
    %359 = vmatprep.subr.mxu0 %v118
    %360 = vmatpush1.msra.mxu0 %v117
    %361 = vmatprep.subr.mxu0 %v115
    %362 = vmatpush1.msra.mxu0 %v114
    %363 = vmatprep.subr.mxu0 %v112
    %364 = vmatpush1.msra.mxu0 %v111
    %365 = vmatprep.subr.mxu0 %v109
    %366 = vmatpush1.msra.mxu0 %v108
    %367 = vmatprep.subr.mxu0 %v106
    %368 = vmatpush1.msra.mxu0 %v105
    %369 = vmatprep.subr.mxu0 %v103
    %370 = vmatpush1.msra.mxu0 %v102
    %371 = vmatprep.subr.mxu0 %v100
    %372 = vmatpush1.msra.mxu0 %v99
    %373 = vmatprep.subr.mxu0 %v97
    %374 = vmatpush1.msra.mxu0 %v96
    %375 = vmatprep.subr.mxu0 %v94
    %376 = vmatpush1.msra.mxu0 %v93
    %377 = vmatprep.subr.mxu0 %v91
    %378 = vmatpush1.msra.mxu0 %v90
    %379 = vmatprep.subr.mxu0 %v88
    %380 = vmatpush1.msra.mxu0 %v87
    %381 = vmatprep.subr.mxu0 %v85
    %382 = vmatpush1.msra.mxu0 %v84
    %383 = vmatprep.subr.mxu0 %v82
    %384 = vmatpush1.msra.mxu0 %v81
    %385 = vmatprep.subr.mxu0 0.0
    %386 = vmatpush2.msra.mxu0 0.0
    %387 = vmatprep.subr.mxu0 0.0
    %388 = vmatpush2.msra.mxu0 0.0
    %389 = vmatprep.subr.mxu0 0.0
    %390 = vmatpush2.msra.mxu0 0.0
    %391 = vmatprep.subr.mxu0 0.0
    %392 = vmatpush2.msra.mxu0 0.0
    %393 = vmatprep.subr.mxu0 0.0
    %394 = vmatpush2.msra.mxu0 0.0
    %395 = vmatprep.subr.mxu0 0.0
    %396 = vmatpush2.msra.mxu0 0.0
    %397 = vmatprep.subr.mxu0 0.0
    %398 = vmatpush2.msra.mxu0 0.0
    %399 = vmatprep.subr.mxu0 0.0
    %400 = vmatpush2.msra.mxu0 0.0
    %401 = vmatprep.subr.mxu0 0.0
    %402 = vmatpush2.msra.mxu0 0.0
    %403 = vmatprep.subr.mxu0 0.0
    %404 = vmatpush2.msra.mxu0 0.0
    %405 = vmatprep.subr.mxu0 0.0
    %406 = vmatpush2.msra.mxu0 0.0
    %407 = vmatprep.subr.mxu0 0.0
    %408 = vmatpush2.msra.mxu0 0.0
    %409 = vmatprep.subr.mxu0 0.0
    %410 = vmatpush2.msra.mxu0 0.0
    %411 = vmatprep.subr.mxu0 0.0
    %412 = vmatpush2.msra.mxu0 0.0
    %413 = vmatprep.subr.mxu0 0.0
    %414 = vmatpush2.msra.mxu0 0.0
    %415 = vmatprep.subr.mxu0 0.0
    %416 = vmatpush2.msra.mxu0 0.0
    %417 = vmatprep.mubr.f32.mxu0 0.0
    %418 = vmatmul.mubr.f32.gmra.mxu0 %v340
    %v419 = vpop.f32.mrf.mxu0
    %v420 = vadd.f32 %v145, %v419
    %v421 = vpop.f32.mrf.mxu0
    %v422 = vadd.f32 %v149, %v421
    %423 = vdwg.mxu0
    %424 = vmatprep.subr.mxu0 0.0
    %425 = vmatpush1.msra.mxu0 %v128
    %426 = vmatprep.subr.mxu0 0.0
    %427 = vmatpush1.msra.mxu0 %v125
    %428 = vmatprep.subr.mxu0 0.0
    %429 = vmatpush1.msra.mxu0 %v122
    %430 = vmatprep.subr.mxu0 0.0
    %431 = vmatpush1.msra.mxu0 %v119
    %432 = vmatprep.subr.mxu0 0.0
    %433 = vmatpush1.msra.mxu0 %v116
    %434 = vmatprep.subr.mxu0 0.0
    %435 = vmatpush1.msra.mxu0 %v113
    %436 = vmatprep.subr.mxu0 0.0
    %437 = vmatpush1.msra.mxu0 %v110
    %438 = vmatprep.subr.mxu0 0.0
    %439 = vmatpush1.msra.mxu0 %v107
    %440 = vmatprep.subr.mxu0 0.0
    %441 = vmatpush1.msra.mxu0 %v104
    %442 = vmatprep.subr.mxu0 0.0
    %443 = vmatpush1.msra.mxu0 %v101
    %444 = vmatprep.subr.mxu0 0.0
    %445 = vmatpush1.msra.mxu0 %v98
    %446 = vmatprep.subr.mxu0 0.0
    %447 = vmatpush1.msra.mxu0 %v95
    %448 = vmatprep.subr.mxu0 0.0
    %449 = vmatpush1.msra.mxu0 %v92
    %450 = vmatprep.subr.mxu0 0.0
    %451 = vmatpush1.msra.mxu0 %v89
    %452 = vmatprep.subr.mxu0 0.0
    %453 = vmatpush1.msra.mxu0 %v86
    %454 = vmatprep.subr.mxu0 0.0
    %455 = vmatpush1.msra.mxu0 %v83
    %456 = vmatprep.subr.mxu0 0.0
    %457 = vmatpush2.msra.mxu0 0.0
    %458 = vmatprep.subr.mxu0 0.0
    %459 = vmatpush2.msra.mxu0 0.0
    %460 = vmatprep.subr.mxu0 0.0
    %461 = vmatpush2.msra.mxu0 0.0
    %462 = vmatprep.subr.mxu0 0.0
    %463 = vmatpush2.msra.mxu0 0.0
    %464 = vmatprep.subr.mxu0 0.0
    %465 = vmatpush2.msra.mxu0 0.0
    %466 = vmatprep.subr.mxu0 0.0
    %467 = vmatpush2.msra.mxu0 0.0
    %468 = vmatprep.subr.mxu0 0.0
    %469 = vmatpush2.msra.mxu0 0.0
    %470 = vmatprep.subr.mxu0 0.0
    %471 = vmatpush2.msra.mxu0 0.0
    %472 = vmatprep.subr.mxu0 0.0
    %473 = vmatpush2.msra.mxu0 0.0
    %474 = vmatprep.subr.mxu0 0.0
    %475 = vmatpush2.msra.mxu0 0.0
    %476 = vmatprep.subr.mxu0 0.0
    %477 = vmatpush2.msra.mxu0 0.0
    %478 = vmatprep.subr.mxu0 0.0
    %479 = vmatpush2.msra.mxu0 0.0
    %480 = vmatprep.subr.mxu0 0.0
    %481 = vmatpush2.msra.mxu0 0.0
    %482 = vmatprep.subr.mxu0 0.0
    %483 = vmatpush2.msra.mxu0 0.0
    %484 = vmatprep.subr.mxu0 0.0
    %485 = vmatpush2.msra.mxu0 0.0
    %486 = vmatprep.subr.mxu0 0.0
    %487 = vmatpush2.msra.mxu0 0.0
    %488 = vmatprep.mubr.f32.mxu0 0.0
    %489 = vmatmul.mubr.f32.gmra.mxu0 %v340
    %v490 = vpop.f32.mrf.mxu0
    %v491 = vadd.f32 %v153, %v490
    %v492 = vpop.f32.mrf.mxu0
    %493 = vdwg.mxu0
    %v496 = vcombine.low %v420, %v422
    %v498 = vunpack.c.l.s4 1966171168
    %v499 = vunpack.c.0.s8 %v498
    %v500 = vlaneseq
    %v501 = vshrl.u32 %v500, 7
    %v502 = vsub.s32 %v499, %v501
    %v503 = vrot.slane %v496, %v502
    %v505 = vunpack.c.l.s4 1966171168
    %v506 = vunpack.c.0.s8 %v505
    %v507 = vlaneseq
    %v508 = vshrl.u32 %v507, 7
    %v509 = vsub.s32 %v506, %v508
    %v510 = vrot.slane %v503, %v509
    %v512 = vadd.f32 %v352, %v510
    %v513 = vxor.u32 %v512, 2147483648
    %v514 = vmul.f32 %v513, 1.442695
    %v515 = vpow.pop %v514
    %v516 = vadd.f32 %v515, 1.0
    %v517 = vrcp.pop %v516
    %v518 = vmul.f32 1.0, %v517
    %v519 = vmul.f32 %v518, %v491
    %v521 = vrot.slane %v352, 2
    %v523 = vadd.f32 %v521, %v519
    %v524 = vtanh.pop %v523
    %v526 = vrot.slane %v518, 1
    %v528 = vsub.f32 1.0, %v526
    %v529 = vmul.f32 %v528, %v524
    %v530 = vmul.f32 %v526, %v340
    %v531 = vadd.f32 %v529, %v530
    %p532 = scmp.lt.s32.totalorder %s342, 8
    %s533 = scalar_select %p532, 1, 0
    %v534 = vstv %s533
    %vm535 = vcmp.eq.s32.totalorder %v534, 1
    %v536 = vsel %vm535, %v531, %v340
    %537 = vst [vmem:[#allocation3 + $0x1] sm:$0x1] %v536
    %s538 = sadd.s32 %s80, 2
    %s539 = sld [smem:[#allocation5 + %s538]]
    %s540 = sshra.s32 %s539, 3
    %s541 = sand.u32 %s539, 7
    %s542 = sshra.s32 %s539, 3
    %s543 = sand.u32 %s539, 7
    %s544 = smul.u32 %s540, 3
    %s545 = smul.u32 %s544, 8
    %s546 = sadd.s32 %s545, %s543
    %s547 = scalar_lea.vmem [#allocation6], %s546
    %v548 = vld [vmem:[%s547] ss:$8 sm:$0x7]
    %549 = vmatprep.subr.mxu0 %v127
    %550 = vmatpush1.msra.mxu0 %v126
    %551 = vmatprep.subr.mxu0 %v124
    %552 = vmatpush1.msra.mxu0 %v123
    %553 = vmatprep.subr.mxu0 %v121
    %554 = vmatpush1.msra.mxu0 %v120
    %555 = vmatprep.subr.mxu0 %v118
    %556 = vmatpush1.msra.mxu0 %v117
    %557 = vmatprep.subr.mxu0 %v115
    %558 = vmatpush1.msra.mxu0 %v114
    %559 = vmatprep.subr.mxu0 %v112
    %560 = vmatpush1.msra.mxu0 %v111
    %561 = vmatprep.subr.mxu0 %v109
    %562 = vmatpush1.msra.mxu0 %v108
    %563 = vmatprep.subr.mxu0 %v106
    %564 = vmatpush1.msra.mxu0 %v105
    %565 = vmatprep.subr.mxu0 %v103
    %566 = vmatpush1.msra.mxu0 %v102
    %567 = vmatprep.subr.mxu0 %v100
    %568 = vmatpush1.msra.mxu0 %v99
    %569 = vmatprep.subr.mxu0 %v97
    %570 = vmatpush1.msra.mxu0 %v96
    %571 = vmatprep.subr.mxu0 %v94
    %572 = vmatpush1.msra.mxu0 %v93
    %573 = vmatprep.subr.mxu0 %v91
    %574 = vmatpush1.msra.mxu0 %v90
    %575 = vmatprep.subr.mxu0 %v88
    %576 = vmatpush1.msra.mxu0 %v87
    %577 = vmatprep.subr.mxu0 %v85
    %578 = vmatpush1.msra.mxu0 %v84
    %579 = vmatprep.subr.mxu0 %v82
    %580 = vmatpush1.msra.mxu0 %v81
    %581 = vmatprep.subr.mxu0 0.0
    %582 = vmatpush2.msra.mxu0 0.0
    %583 = vmatprep.subr.mxu0 0.0
    %584 = vmatpush2.msra.mxu0 0.0
    %585 = vmatprep.subr.mxu0 0.0
    %586 = vmatpush2.msra.mxu0 0.0
    %587 = vmatprep.subr.mxu0 0.0
    %588 = vmatpush2.msra.mxu0 0.0
    %589 = vmatprep.subr.mxu0 0.0
    %590 = vmatpush2.msra.mxu0 0.0
    %591 = vmatprep.subr.mxu0 0.0
    %592 = vmatpush2.msra.mxu0 0.0
    %593 = vmatprep.subr.mxu0 0.0
    %594 = vmatpush2.msra.mxu0 0.0
    %595 = vmatprep.subr.mxu0 0.0
    %596 = vmatpush2.msra.mxu0 0.0
    %597 = vmatprep.subr.mxu0 0.0
    %598 = vmatpush2.msra.mxu0 0.0
    %599 = vmatprep.subr.mxu0 0.0
    %600 = vmatpush2.msra.mxu0 0.0
    %601 = vmatprep.subr.mxu0 0.0
    %602 = vmatpush2.msra.mxu0 0.0
    %603 = vmatprep.subr.mxu0 0.0
    %604 = vmatpush2.msra.mxu0 0.0
    %605 = vmatprep.subr.mxu0 0.0
    %606 = vmatpush2.msra.mxu0 0.0
    %607 = vmatprep.subr.mxu0 0.0
    %608 = vmatpush2.msra.mxu0 0.0
    %609 = vmatprep.subr.mxu0 0.0
    %610 = vmatpush2.msra.mxu0 0.0
    %611 = vmatprep.subr.mxu0 0.0
    %612 = vmatpush2.msra.mxu0 0.0
    %613 = vmatprep.mubr.f32.mxu0 0.0
    %614 = vmatmul.mubr.f32.gmra.mxu0 %v536
    %v615 = vpop.f32.mrf.mxu0
    %v616 = vadd.f32 %v145, %v615
    %v617 = vpop.f32.mrf.mxu0
    %v618 = vadd.f32 %v149, %v617
    %619 = vdwg.mxu0
    %620 = vmatprep.subr.mxu0 0.0
    %621 = vmatpush1.msra.mxu0 %v128
    %622 = vmatprep.subr.mxu0 0.0
    %623 = vmatpush1.msra.mxu0 %v125
    %624 = vmatprep.subr.mxu0 0.0
    %625 = vmatpush1.msra.mxu0 %v122
    %626 = vmatprep.subr.mxu0 0.0
    %627 = vmatpush1.msra.mxu0 %v119
    %628 = vmatprep.subr.mxu0 0.0
    %629 = vmatpush1.msra.mxu0 %v116
    %630 = vmatprep.subr.mxu0 0.0
    %631 = vmatpush1.msra.mxu0 %v113
    %632 = vmatprep.subr.mxu0 0.0
    %633 = vmatpush1.msra.mxu0 %v110
    %634 = vmatprep.subr.mxu0 0.0
    %635 = vmatpush1.msra.mxu0 %v107
    %636 = vmatprep.subr.mxu0 0.0
    %637 = vmatpush1.msra.mxu0 %v104
    %638 = vmatprep.subr.mxu0 0.0
    %639 = vmatpush1.msra.mxu0 %v101
    %640 = vmatprep.subr.mxu0 0.0
    %641 = vmatpush1.msra.mxu0 %v98
    %642 = vmatprep.subr.mxu0 0.0
    %643 = vmatpush1.msra.mxu0 %v95
    %644 = vmatprep.subr.mxu0 0.0
    %645 = vmatpush1.msra.mxu0 %v92
    %646 = vmatprep.subr.mxu0 0.0
    %647 = vmatpush1.msra.mxu0 %v89
    %648 = vmatprep.subr.mxu0 0.0
    %649 = vmatpush1.msra.mxu0 %v86
    %650 = vmatprep.subr.mxu0 0.0
    %651 = vmatpush1.msra.mxu0 %v83
    %652 = vmatprep.subr.mxu0 0.0
    %653 = vmatpush2.msra.mxu0 0.0
    %654 = vmatprep.subr.mxu0 0.0
    %655 = vmatpush2.msra.mxu0 0.0
    %656 = vmatprep.subr.mxu0 0.0
    %657 = vmatpush2.msra.mxu0 0.0
    %658 = vmatprep.subr.mxu0 0.0
    %659 = vmatpush2.msra.mxu0 0.0
    %660 = vmatprep.subr.mxu0 0.0
    %661 = vmatpush2.msra.mxu0 0.0
    %662 = vmatprep.subr.mxu0 0.0
    %663 = vmatpush2.msra.mxu0 0.0
    %664 = vmatprep.subr.mxu0 0.0
    %665 = vmatpush2.msra.mxu0 0.0
    %666 = vmatprep.subr.mxu0 0.0
    %667 = vmatpush2.msra.mxu0 0.0
    %668 = vmatprep.subr.mxu0 0.0
    %669 = vmatpush2.msra.mxu0 0.0
    %670 = vmatprep.subr.mxu0 0.0
    %671 = vmatpush2.msra.mxu0 0.0
    %672 = vmatprep.subr.mxu0 0.0
    %673 = vmatpush2.msra.mxu0 0.0
    %674 = vmatprep.subr.mxu0 0.0
    %675 = vmatpush2.msra.mxu0 0.0
    %676 = vmatprep.subr.mxu0 0.0
    %677 = vmatpush2.msra.mxu0 0.0
    %678 = vmatprep.subr.mxu0 0.0
    %679 = vmatpush2.msra.mxu0 0.0
    %680 = vmatprep.subr.mxu0 0.0
    %681 = vmatpush2.msra.mxu0 0.0
    %682 = vmatprep.subr.mxu0 0.0
    %683 = vmatpush2.msra.mxu0 0.0
    %684 = vmatprep.mubr.f32.mxu0 0.0
    %685 = vmatmul.mubr.f32.gmra.mxu0 %v536
    %v686 = vpop.f32.mrf.mxu0
    %v687 = vadd.f32 %v153, %v686
    %v688 = vpop.f32.mrf.mxu0
    %689 = vdwg.mxu0
    %v692 = vcombine.low %v616, %v618
    %v694 = vunpack.c.l.s4 1966171168
    %v695 = vunpack.c.0.s8 %v694
    %v696 = vlaneseq
    %v697 = vshrl.u32 %v696, 7
    %v698 = vsub.s32 %v695, %v697
    %v699 = vrot.slane %v692, %v698
    %v701 = vunpack.c.l.s4 1966171168
    %v702 = vunpack.c.0.s8 %v701
    %v703 = vlaneseq
    %v704 = vshrl.u32 %v703, 7
    %v705 = vsub.s32 %v702, %v704
    %v706 = vrot.slane %v699, %v705
    %v708 = vadd.f32 %v548, %v706
    %v709 = vxor.u32 %v708, 2147483648
    %v710 = vmul.f32 %v709, 1.442695
    %v711 = vpow.pop %v710
    %v712 = vadd.f32 %v711, 1.0
    %v713 = vrcp.pop %v712
    %v714 = vmul.f32 1.0, %v713
    %v715 = vmul.f32 %v714, %v687
    %v717 = vrot.slane %v548, 2
    %v719 = vadd.f32 %v717, %v715
    %v720 = vtanh.pop %v719
    %v722 = vrot.slane %v714, 1
    %v724 = vsub.f32 1.0, %v722
    %v725 = vmul.f32 %v724, %v720
    %v726 = vmul.f32 %v722, %v536
    %v727 = vadd.f32 %v725, %v726
    %p728 = scmp.lt.s32.totalorder %s538, 8
    %s729 = scalar_select %p728, 1, 0
    %v730 = vstv %s729
    %vm731 = vcmp.eq.s32.totalorder %v730, 1
    %v732 = vsel %vm731, %v727, %v536
    %733 = vst [vmem:[#allocation3 + $0x2] sm:$0x1] %v732
    %s734 = sadd.s32 %s80, 3
    %s735 = sld [smem:[#allocation5 + %s734]]
    %s736 = sshra.s32 %s735, 3
    %s737 = sand.u32 %s735, 7
    %s738 = sshra.s32 %s735, 3
    %s739 = sand.u32 %s735, 7
    %s740 = smul.u32 %s736, 3
    %s741 = smul.u32 %s740, 8
    %s742 = sadd.s32 %s741, %s739
    %s743 = scalar_lea.vmem [#allocation6], %s742
    %v744 = vld [vmem:[%s743] ss:$8 sm:$0x7]
    %745 = vmatprep.subr.mxu0 %v127
    %746 = vmatpush1.msra.mxu0 %v126
    %747 = vmatprep.subr.mxu0 %v124
    %748 = vmatpush1.msra.mxu0 %v123
    %749 = vmatprep.subr.mxu0 %v121
    %750 = vmatpush1.msra.mxu0 %v120
    %751 = vmatprep.subr.mxu0 %v118
    %752 = vmatpush1.msra.mxu0 %v117
    %753 = vmatprep.subr.mxu0 %v115
    %754 = vmatpush1.msra.mxu0 %v114
    %755 = vmatprep.subr.mxu0 %v112
    %756 = vmatpush1.msra.mxu0 %v111
    %757 = vmatprep.subr.mxu0 %v109
    %758 = vmatpush1.msra.mxu0 %v108
    %759 = vmatprep.subr.mxu0 %v106
    %760 = vmatpush1.msra.mxu0 %v105
    %761 = vmatprep.subr.mxu0 %v103
    %762 = vmatpush1.msra.mxu0 %v102
    %763 = vmatprep.subr.mxu0 %v100
    %764 = vmatpush1.msra.mxu0 %v99
    %765 = vmatprep.subr.mxu0 %v97
    %766 = vmatpush1.msra.mxu0 %v96
    %767 = vmatprep.subr.mxu0 %v94
    %768 = vmatpush1.msra.mxu0 %v93
    %769 = vmatprep.subr.mxu0 %v91
    %770 = vmatpush1.msra.mxu0 %v90
    %771 = vmatprep.subr.mxu0 %v88
    %772 = vmatpush1.msra.mxu0 %v87
    %773 = vmatprep.subr.mxu0 %v85
    %774 = vmatpush1.msra.mxu0 %v84
    %775 = vmatprep.subr.mxu0 %v82
    %776 = vmatpush1.msra.mxu0 %v81
    %777 = vmatprep.subr.mxu0 0.0
    %778 = vmatpush2.msra.mxu0 0.0
    %779 = vmatprep.subr.mxu0 0.0
    %780 = vmatpush2.msra.mxu0 0.0
    %781 = vmatprep.subr.mxu0 0.0
    %782 = vmatpush2.msra.mxu0 0.0
    %783 = vmatprep.subr.mxu0 0.0
    %784 = vmatpush2.msra.mxu0 0.0
    %785 = vmatprep.subr.mxu0 0.0
    %786 = vmatpush2.msra.mxu0 0.0
    %787 = vmatprep.subr.mxu0 0.0
    %788 = vmatpush2.msra.mxu0 0.0
    %789 = vmatprep.subr.mxu0 0.0
    %790 = vmatpush2.msra.mxu0 0.0
    %791 = vmatprep.subr.mxu0 0.0
    %792 = vmatpush2.msra.mxu0 0.0
    %793 = vmatprep.subr.mxu0 0.0
    %794 = vmatpush2.msra.mxu0 0.0
    %795 = vmatprep.subr.mxu0 0.0
    %796 = vmatpush2.msra.mxu0 0.0
    %797 = vmatprep.subr.mxu0 0.0
    %798 = vmatpush2.msra.mxu0 0.0
    %799 = vmatprep.subr.mxu0 0.0
    %800 = vmatpush2.msra.mxu0 0.0
    %801 = vmatprep.subr.mxu0 0.0
    %802 = vmatpush2.msra.mxu0 0.0
    %803 = vmatprep.subr.mxu0 0.0
    %804 = vmatpush2.msra.mxu0 0.0
    %805 = vmatprep.subr.mxu0 0.0
    %806 = vmatpush2.msra.mxu0 0.0
    %807 = vmatprep.subr.mxu0 0.0
    %808 = vmatpush2.msra.mxu0 0.0
    %809 = vmatprep.mubr.f32.mxu0 0.0
    %810 = vmatmul.mubr.f32.gmra.mxu0 %v732
    %v811 = vpop.f32.mrf.mxu0
    %v812 = vadd.f32 %v145, %v811
    %v813 = vpop.f32.mrf.mxu0
    %v814 = vadd.f32 %v149, %v813
    %815 = vdwg.mxu0
    %816 = vmatprep.subr.mxu0 0.0
    %817 = vmatpush1.msra.mxu0 %v128
    %818 = vmatprep.subr.mxu0 0.0
    %819 = vmatpush1.msra.mxu0 %v125
    %820 = vmatprep.subr.mxu0 0.0
    %821 = vmatpush1.msra.mxu0 %v122
    %822 = vmatprep.subr.mxu0 0.0
    %823 = vmatpush1.msra.mxu0 %v119
    %824 = vmatprep.subr.mxu0 0.0
    %825 = vmatpush1.msra.mxu0 %v116
    %826 = vmatprep.subr.mxu0 0.0
    %827 = vmatpush1.msra.mxu0 %v113
    %828 = vmatprep.subr.mxu0 0.0
    %829 = vmatpush1.msra.mxu0 %v110
    %830 = vmatprep.subr.mxu0 0.0
    %831 = vmatpush1.msra.mxu0 %v107
    %832 = vmatprep.subr.mxu0 0.0
    %833 = vmatpush1.msra.mxu0 %v104
    %834 = vmatprep.subr.mxu0 0.0
    %835 = vmatpush1.msra.mxu0 %v101
    %836 = vmatprep.subr.mxu0 0.0
    %837 = vmatpush1.msra.mxu0 %v98
    %838 = vmatprep.subr.mxu0 0.0
    %839 = vmatpush1.msra.mxu0 %v95
    %840 = vmatprep.subr.mxu0 0.0
    %841 = vmatpush1.msra.mxu0 %v92
    %842 = vmatprep.subr.mxu0 0.0
    %843 = vmatpush1.msra.mxu0 %v89
    %844 = vmatprep.subr.mxu0 0.0
    %845 = vmatpush1.msra.mxu0 %v86
    %846 = vmatprep.subr.mxu0 0.0
    %847 = vmatpush1.msra.mxu0 %v83
    %848 = vmatprep.subr.mxu0 0.0
    %849 = vmatpush2.msra.mxu0 0.0
    %850 = vmatprep.subr.mxu0 0.0
    %851 = vmatpush2.msra.mxu0 0.0
    %852 = vmatprep.subr.mxu0 0.0
    %853 = vmatpush2.msra.mxu0 0.0
    %854 = vmatprep.subr.mxu0 0.0
    %855 = vmatpush2.msra.mxu0 0.0
    %856 = vmatprep.subr.mxu0 0.0
    %857 = vmatpush2.msra.mxu0 0.0
    %858 = vmatprep.subr.mxu0 0.0
    %859 = vmatpush2.msra.mxu0 0.0
    %860 = vmatprep.subr.mxu0 0.0
    %861 = vmatpush2.msra.mxu0 0.0
    %862 = vmatprep.subr.mxu0 0.0
    %863 = vmatpush2.msra.mxu0 0.0
    %864 = vmatprep.subr.mxu0 0.0
    %865 = vmatpush2.msra.mxu0 0.0
    %866 = vmatprep.subr.mxu0 0.0
    %867 = vmatpush2.msra.mxu0 0.0
    %868 = vmatprep.subr.mxu0 0.0
    %869 = vmatpush2.msra.mxu0 0.0
    %870 = vmatprep.subr.mxu0 0.0
    %871 = vmatpush2.msra.mxu0 0.0
    %872 = vmatprep.subr.mxu0 0.0
    %873 = vmatpush2.msra.mxu0 0.0
    %874 = vmatprep.subr.mxu0 0.0
    %875 = vmatpush2.msra.mxu0 0.0
    %876 = vmatprep.subr.mxu0 0.0
    %877 = vmatpush2.msra.mxu0 0.0
    %878 = vmatprep.subr.mxu0 0.0
    %879 = vmatpush2.msra.mxu0 0.0
    %880 = vmatprep.mubr.f32.mxu0 0.0
    %881 = vmatmul.mubr.f32.gmra.mxu0 %v732
    %v882 = vpop.f32.mrf.mxu0
    %v883 = vadd.f32 %v153, %v882
    %v884 = vpop.f32.mrf.mxu0
    %885 = vdwg.mxu0
    %v888 = vcombine.low %v812, %v814
    %v890 = vunpack.c.l.s4 1966171168
    %v891 = vunpack.c.0.s8 %v890
    %v892 = vlaneseq
    %v893 = vshrl.u32 %v892, 7
    %v894 = vsub.s32 %v891, %v893
    %v895 = vrot.slane %v888, %v894
    %v897 = vunpack.c.l.s4 1966171168
    %v898 = vunpack.c.0.s8 %v897
    %v899 = vlaneseq
    %v900 = vshrl.u32 %v899, 7
    %v901 = vsub.s32 %v898, %v900
    %v902 = vrot.slane %v895, %v901
    %v904 = vadd.f32 %v744, %v902
    %v905 = vxor.u32 %v904, 2147483648
    %v906 = vmul.f32 %v905, 1.442695
    %v907 = vpow.pop %v906
    %v908 = vadd.f32 %v907, 1.0
    %v909 = vrcp.pop %v908
    %v910 = vmul.f32 1.0, %v909
    %v911 = vmul.f32 %v910, %v883
    %v913 = vrot.slane %v744, 2
    %v915 = vadd.f32 %v913, %v911
    %v916 = vtanh.pop %v915
    %v918 = vrot.slane %v910, 1
    %v920 = vsub.f32 1.0, %v918
    %v921 = vmul.f32 %v920, %v916
    %v922 = vmul.f32 %v918, %v732
    %v923 = vadd.f32 %v921, %v922
    %p924 = scmp.lt.s32.totalorder %s734, 8
    %s925 = scalar_select %p924, 1, 0
    %v926 = vstv %s925
    %vm927 = vcmp.eq.s32.totalorder %v926, 1
    %v928 = vsel %vm927, %v923, %v732
    %929 = vst [vmem:[#allocation3 + $0x3] sm:$0x1] %v928
    %s930 = sadd.s32 %s80, 4
    %s931 = sld [smem:[#allocation5 + %s930]]
    %s932 = sshra.s32 %s931, 3
    %s933 = sand.u32 %s931, 7
    %s934 = sshra.s32 %s931, 3
    %s935 = sand.u32 %s931, 7
    %s936 = smul.u32 %s932, 3
    %s937 = smul.u32 %s936, 8
    %s938 = sadd.s32 %s937, %s935
    %s939 = scalar_lea.vmem [#allocation6], %s938
    %v940 = vld [vmem:[%s939] ss:$8 sm:$0x7]
    %941 = vmatprep.subr.mxu0 %v127
    %942 = vmatpush1.msra.mxu0 %v126
    %943 = vmatprep.subr.mxu0 %v124
    %944 = vmatpush1.msra.mxu0 %v123
    %945 = vmatprep.subr.mxu0 %v121
    %946 = vmatpush1.msra.mxu0 %v120
    %947 = vmatprep.subr.mxu0 %v118
    %948 = vmatpush1.msra.mxu0 %v117
    %949 = vmatprep.subr.mxu0 %v115
    %950 = vmatpush1.msra.mxu0 %v114
    %951 = vmatprep.subr.mxu0 %v112
    %952 = vmatpush1.msra.mxu0 %v111
    %953 = vmatprep.subr.mxu0 %v109
    %954 = vmatpush1.msra.mxu0 %v108
    %955 = vmatprep.subr.mxu0 %v106
    %956 = vmatpush1.msra.mxu0 %v105
    %957 = vmatprep.subr.mxu0 %v103
    %958 = vmatpush1.msra.mxu0 %v102
    %959 = vmatprep.subr.mxu0 %v100
    %960 = vmatpush1.msra.mxu0 %v99
    %961 = vmatprep.subr.mxu0 %v97
    %962 = vmatpush1.msra.mxu0 %v96
    %963 = vmatprep.subr.mxu0 %v94
    %964 = vmatpush1.msra.mxu0 %v93
    %965 = vmatprep.subr.mxu0 %v91
    %966 = vmatpush1.msra.mxu0 %v90
    %967 = vmatprep.subr.mxu0 %v88
    %968 = vmatpush1.msra.mxu0 %v87
    %969 = vmatprep.subr.mxu0 %v85
    %970 = vmatpush1.msra.mxu0 %v84
    %971 = vmatprep.subr.mxu0 %v82
    %972 = vmatpush1.msra.mxu0 %v81
    %973 = vmatprep.subr.mxu0 0.0
    %974 = vmatpush2.msra.mxu0 0.0
    %975 = vmatprep.subr.mxu0 0.0
    %976 = vmatpush2.msra.mxu0 0.0
    %977 = vmatprep.subr.mxu0 0.0
    %978 = vmatpush2.msra.mxu0 0.0
    %979 = vmatprep.subr.mxu0 0.0
    %980 = vmatpush2.msra.mxu0 0.0
    %981 = vmatprep.subr.mxu0 0.0
    %982 = vmatpush2.msra.mxu0 0.0
    %983 = vmatprep.subr.mxu0 0.0
    %984 = vmatpush2.msra.mxu0 0.0
    %985 = vmatprep.subr.mxu0 0.0
    %986 = vmatpush2.msra.mxu0 0.0
    %987 = vmatprep.subr.mxu0 0.0
    %988 = vmatpush2.msra.mxu0 0.0
    %989 = vmatprep.subr.mxu0 0.0
    %990 = vmatpush2.msra.mxu0 0.0
    %991 = vmatprep.subr.mxu0 0.0
    %992 = vmatpush2.msra.mxu0 0.0
    %993 = vmatprep.subr.mxu0 0.0
    %994 = vmatpush2.msra.mxu0 0.0
    %995 = vmatprep.subr.mxu0 0.0
    %996 = vmatpush2.msra.mxu0 0.0
    %997 = vmatprep.subr.mxu0 0.0
    %998 = vmatpush2.msra.mxu0 0.0
    %999 = vmatprep.subr.mxu0 0.0
    %1000 = vmatpush2.msra.mxu0 0.0
    %1001 = vmatprep.subr.mxu0 0.0
    %1002 = vmatpush2.msra.mxu0 0.0
    %1003 = vmatprep.subr.mxu0 0.0
    %1004 = vmatpush2.msra.mxu0 0.0
    %1005 = vmatprep.mubr.f32.mxu0 0.0
    %1006 = vmatmul.mubr.f32.gmra.mxu0 %v928
    %v1007 = vpop.f32.mrf.mxu0
    %v1008 = vadd.f32 %v145, %v1007
    %v1009 = vpop.f32.mrf.mxu0
    %v1010 = vadd.f32 %v149, %v1009
    %1011 = vdwg.mxu0
    %1012 = vmatprep.subr.mxu0 0.0
    %1013 = vmatpush1.msra.mxu0 %v128
    %1014 = vmatprep.subr.mxu0 0.0
    %1015 = vmatpush1.msra.mxu0 %v125
    %1016 = vmatprep.subr.mxu0 0.0
    %1017 = vmatpush1.msra.mxu0 %v122
    %1018 = vmatprep.subr.mxu0 0.0
    %1019 = vmatpush1.msra.mxu0 %v119
    %1020 = vmatprep.subr.mxu0 0.0
    %1021 = vmatpush1.msra.mxu0 %v116
    %1022 = vmatprep.subr.mxu0 0.0
    %1023 = vmatpush1.msra.mxu0 %v113
    %1024 = vmatprep.subr.mxu0 0.0
    %1025 = vmatpush1.msra.mxu0 %v110
    %1026 = vmatprep.subr.mxu0 0.0
    %1027 = vmatpush1.msra.mxu0 %v107
    %1028 = vmatprep.subr.mxu0 0.0
    %1029 = vmatpush1.msra.mxu0 %v104
    %1030 = vmatprep.subr.mxu0 0.0
    %1031 = vmatpush1.msra.mxu0 %v101
    %1032 = vmatprep.subr.mxu0 0.0
    %1033 = vmatpush1.msra.mxu0 %v98
    %1034 = vmatprep.subr.mxu0 0.0
    %1035 = vmatpush1.msra.mxu0 %v95
    %1036 = vmatprep.subr.mxu0 0.0
    %1037 = vmatpush1.msra.mxu0 %v92
    %1038 = vmatprep.subr.mxu0 0.0
    %1039 = vmatpush1.msra.mxu0 %v89
    %1040 = vmatprep.subr.mxu0 0.0
    %1041 = vmatpush1.msra.mxu0 %v86
    %1042 = vmatprep.subr.mxu0 0.0
    %1043 = vmatpush1.msra.mxu0 %v83
    %1044 = vmatprep.subr.mxu0 0.0
    %1045 = vmatpush2.msra.mxu0 0.0
    %1046 = vmatprep.subr.mxu0 0.0
    %1047 = vmatpush2.msra.mxu0 0.0
    %1048 = vmatprep.subr.mxu0 0.0
    %1049 = vmatpush2.msra.mxu0 0.0
    %1050 = vmatprep.subr.mxu0 0.0
    %1051 = vmatpush2.msra.mxu0 0.0
    %1052 = vmatprep.subr.mxu0 0.0
    %1053 = vmatpush2.msra.mxu0 0.0
    %1054 = vmatprep.subr.mxu0 0.0
    %1055 = vmatpush2.msra.mxu0 0.0
    %1056 = vmatprep.subr.mxu0 0.0
    %1057 = vmatpush2.msra.mxu0 0.0
    %1058 = vmatprep.subr.mxu0 0.0
    %1059 = vmatpush2.msra.mxu0 0.0
    %1060 = vmatprep.subr.mxu0 0.0
    %1061 = vmatpush2.msra.mxu0 0.0
    %1062 = vmatprep.subr.mxu0 0.0
    %1063 = vmatpush2.msra.mxu0 0.0
    %1064 = vmatprep.subr.mxu0 0.0
    %1065 = vmatpush2.msra.mxu0 0.0
    %1066 = vmatprep.subr.mxu0 0.0
    %1067 = vmatpush2.msra.mxu0 0.0
    %1068 = vmatprep.subr.mxu0 0.0
    %1069 = vmatpush2.msra.mxu0 0.0
    %1070 = vmatprep.subr.mxu0 0.0
    %1071 = vmatpush2.msra.mxu0 0.0
    %1072 = vmatprep.subr.mxu0 0.0
    %1073 = vmatpush2.msra.mxu0 0.0
    %1074 = vmatprep.subr.mxu0 0.0
    %1075 = vmatpush2.msra.mxu0 0.0
    %1076 = vmatprep.mubr.f32.mxu0 0.0
    %1077 = vmatmul.mubr.f32.gmra.mxu0 %v928
    %v1078 = vpop.f32.mrf.mxu0
    %v1079 = vadd.f32 %v153, %v1078
    %v1080 = vpop.f32.mrf.mxu0
    %1081 = vdwg.mxu0
    %v1084 = vcombine.low %v1008, %v1010
    %v1086 = vunpack.c.l.s4 1966171168
    %v1087 = vunpack.c.0.s8 %v1086
    %v1088 = vlaneseq
    %v1089 = vshrl.u32 %v1088, 7
    %v1090 = vsub.s32 %v1087, %v1089
    %v1091 = vrot.slane %v1084, %v1090
    %v1093 = vunpack.c.l.s4 1966171168
    %v1094 = vunpack.c.0.s8 %v1093
    %v1095 = vlaneseq
    %v1096 = vshrl.u32 %v1095, 7
    %v1097 = vsub.s32 %v1094, %v1096
    %v1098 = vrot.slane %v1091, %v1097
    %v1100 = vadd.f32 %v940, %v1098
    %v1101 = vxor.u32 %v1100, 2147483648
    %v1102 = vmul.f32 %v1101, 1.442695
    %v1103 = vpow.pop %v1102
    %v1104 = vadd.f32 %v1103, 1.0
    %v1105 = vrcp.pop %v1104
    %v1106 = vmul.f32 1.0, %v1105
    %v1107 = vmul.f32 %v1106, %v1079
    %v1109 = vrot.slane %v940, 2
    %v1111 = vadd.f32 %v1109, %v1107
    %v1112 = vtanh.pop %v1111
    %v1114 = vrot.slane %v1106, 1
    %v1116 = vsub.f32 1.0, %v1114
    %v1117 = vmul.f32 %v1116, %v1112
    %v1118 = vmul.f32 %v1114, %v928
    %v1119 = vadd.f32 %v1117, %v1118
    %p1120 = scmp.lt.s32.totalorder %s930, 8
    %s1121 = scalar_select %p1120, 1, 0
    %v1122 = vstv %s1121
    %vm1123 = vcmp.eq.s32.totalorder %v1122, 1
    %v1124 = vsel %vm1123, %v1119, %v928
    %1125 = vst [vmem:[#allocation3 + $0x4] sm:$0x1] %v1124
    %s1126 = sadd.s32 %s80, 5
    %s1127 = sld [smem:[#allocation5 + %s1126]]
    %s1128 = sshra.s32 %s1127, 3
    %s1129 = sand.u32 %s1127, 7
    %s1130 = sshra.s32 %s1127, 3
    %s1131 = sand.u32 %s1127, 7
    %s1132 = smul.u32 %s1128, 3
    %s1133 = smul.u32 %s1132, 8
    %s1134 = sadd.s32 %s1133, %s1131
    %s1135 = scalar_lea.vmem [#allocation6], %s1134
    %v1136 = vld [vmem:[%s1135] ss:$8 sm:$0x7]
    %1137 = vmatprep.subr.mxu0 %v127
    %1138 = vmatpush1.msra.mxu0 %v126
    %1139 = vmatprep.subr.mxu0 %v124
    %1140 = vmatpush1.msra.mxu0 %v123
    %1141 = vmatprep.subr.mxu0 %v121
    %1142 = vmatpush1.msra.mxu0 %v120
    %1143 = vmatprep.subr.mxu0 %v118
    %1144 = vmatpush1.msra.mxu0 %v117
    %1145 = vmatprep.subr.mxu0 %v115
    %1146 = vmatpush1.msra.mxu0 %v114
    %1147 = vmatprep.subr.mxu0 %v112
    %1148 = vmatpush1.msra.mxu0 %v111
    %1149 = vmatprep.subr.mxu0 %v109
    %1150 = vmatpush1.msra.mxu0 %v108
    %1151 = vmatprep.subr.mxu0 %v106
    %1152 = vmatpush1.msra.mxu0 %v105
    %1153 = vmatprep.subr.mxu0 %v103
    %1154 = vmatpush1.msra.mxu0 %v102
    %1155 = vmatprep.subr.mxu0 %v100
    %1156 = vmatpush1.msra.mxu0 %v99
    %1157 = vmatprep.subr.mxu0 %v97
    %1158 = vmatpush1.msra.mxu0 %v96
    %1159 = vmatprep.subr.mxu0 %v94
    %1160 = vmatpush1.msra.mxu0 %v93
    %1161 = vmatprep.subr.mxu0 %v91
    %1162 = vmatpush1.msra.mxu0 %v90
    %1163 = vmatprep.subr.mxu0 %v88
    %1164 = vmatpush1.msra.mxu0 %v87
    %1165 = vmatprep.subr.mxu0 %v85
    %1166 = vmatpush1.msra.mxu0 %v84
    %1167 = vmatprep.subr.mxu0 %v82
    %1168 = vmatpush1.msra.mxu0 %v81
    %1169 = vmatprep.subr.mxu0 0.0
    %1170 = vmatpush2.msra.mxu0 0.0
    %1171 = vmatprep.subr.mxu0 0.0
    %1172 = vmatpush2.msra.mxu0 0.0
    %1173 = vmatprep.subr.mxu0 0.0
    %1174 = vmatpush2.msra.mxu0 0.0
    %1175 = vmatprep.subr.mxu0 0.0
    %1176 = vmatpush2.msra.mxu0 0.0
    %1177 = vmatprep.subr.mxu0 0.0
    %1178 = vmatpush2.msra.mxu0 0.0
    %1179 = vmatprep.subr.mxu0 0.0
    %1180 = vmatpush2.msra.mxu0 0.0
    %1181 = vmatprep.subr.mxu0 0.0
    %1182 = vmatpush2.msra.mxu0 0.0
    %1183 = vmatprep.subr.mxu0 0.0
    %1184 = vmatpush2.msra.mxu0 0.0
    %1185 = vmatprep.subr.mxu0 0.0
    %1186 = vmatpush2.msra.mxu0 0.0
    %1187 = vmatprep.subr.mxu0 0.0
    %1188 = vmatpush2.msra.mxu0 0.0
    %1189 = vmatprep.subr.mxu0 0.0
    %1190 = vmatpush2.msra.mxu0 0.0
    %1191 = vmatprep.subr.mxu0 0.0
    %1192 = vmatpush2.msra.mxu0 0.0
    %1193 = vmatprep.subr.mxu0 0.0
    %1194 = vmatpush2.msra.mxu0 0.0
    %1195 = vmatprep.subr.mxu0 0.0
    %1196 = vmatpush2.msra.mxu0 0.0
    %1197 = vmatprep.subr.mxu0 0.0
    %1198 = vmatpush2.msra.mxu0 0.0
    %1199 = vmatprep.subr.mxu0 0.0
    %1200 = vmatpush2.msra.mxu0 0.0
    %1201 = vmatprep.mubr.f32.mxu0 0.0
    %1202 = vmatmul.mubr.f32.gmra.mxu0 %v1124
    %v1203 = vpop.f32.mrf.mxu0
    %v1204 = vadd.f32 %v145, %v1203
    %v1205 = vpop.f32.mrf.mxu0
    %v1206 = vadd.f32 %v149, %v1205
    %1207 = vdwg.mxu0
    %1208 = vmatprep.subr.mxu0 0.0
    %1209 = vmatpush1.msra.mxu0 %v128
    %1210 = vmatprep.subr.mxu0 0.0
    %1211 = vmatpush1.msra.mxu0 %v125
    %1212 = vmatprep.subr.mxu0 0.0
    %1213 = vmatpush1.msra.mxu0 %v122
    %1214 = vmatprep.subr.mxu0 0.0
    %1215 = vmatpush1.msra.mxu0 %v119
    %1216 = vmatprep.subr.mxu0 0.0
    %1217 = vmatpush1.msra.mxu0 %v116
    %1218 = vmatprep.subr.mxu0 0.0
    %1219 = vmatpush1.msra.mxu0 %v113
    %1220 = vmatprep.subr.mxu0 0.0
    %1221 = vmatpush1.msra.mxu0 %v110
    %1222 = vmatprep.subr.mxu0 0.0
    %1223 = vmatpush1.msra.mxu0 %v107
    %1224 = vmatprep.subr.mxu0 0.0
    %1225 = vmatpush1.msra.mxu0 %v104
    %1226 = vmatprep.subr.mxu0 0.0
    %1227 = vmatpush1.msra.mxu0 %v101
    %1228 = vmatprep.subr.mxu0 0.0
    %1229 = vmatpush1.msra.mxu0 %v98
    %1230 = vmatprep.subr.mxu0 0.0
    %1231 = vmatpush1.msra.mxu0 %v95
    %1232 = vmatprep.subr.mxu0 0.0
    %1233 = vmatpush1.msra.mxu0 %v92
    %1234 = vmatprep.subr.mxu0 0.0
    %1235 = vmatpush1.msra.mxu0 %v89
    %1236 = vmatprep.subr.mxu0 0.0
    %1237 = vmatpush1.msra.mxu0 %v86
    %1238 = vmatprep.subr.mxu0 0.0
    %1239 = vmatpush1.msra.mxu0 %v83
    %1240 = vmatprep.subr.mxu0 0.0
    %1241 = vmatpush2.msra.mxu0 0.0
    %1242 = vmatprep.subr.mxu0 0.0
    %1243 = vmatpush2.msra.mxu0 0.0
    %1244 = vmatprep.subr.mxu0 0.0
    %1245 = vmatpush2.msra.mxu0 0.0
    %1246 = vmatprep.subr.mxu0 0.0
    %1247 = vmatpush2.msra.mxu0 0.0
    %1248 = vmatprep.subr.mxu0 0.0
    %1249 = vmatpush2.msra.mxu0 0.0
    %1250 = vmatprep.subr.mxu0 0.0
    %1251 = vmatpush2.msra.mxu0 0.0
    %1252 = vmatprep.subr.mxu0 0.0
    %1253 = vmatpush2.msra.mxu0 0.0
    %1254 = vmatprep.subr.mxu0 0.0
    %1255 = vmatpush2.msra.mxu0 0.0
    %1256 = vmatprep.subr.mxu0 0.0
    %1257 = vmatpush2.msra.mxu0 0.0
    %1258 = vmatprep.subr.mxu0 0.0
    %1259 = vmatpush2.msra.mxu0 0.0
    %1260 = vmatprep.subr.mxu0 0.0
    %1261 = vmatpush2.msra.mxu0 0.0
    %1262 = vmatprep.subr.mxu0 0.0
    %1263 = vmatpush2.msra.mxu0 0.0
    %1264 = vmatprep.subr.mxu0 0.0
    %1265 = vmatpush2.msra.mxu0 0.0
    %1266 = vmatprep.subr.mxu0 0.0
    %1267 = vmatpush2.msra.mxu0 0.0
    %1268 = vmatprep.subr.mxu0 0.0
    %1269 = vmatpush2.msra.mxu0 0.0
    %1270 = vmatprep.subr.mxu0 0.0
    %1271 = vmatpush2.msra.mxu0 0.0
    %1272 = vmatprep.mubr.f32.mxu0 0.0
    %1273 = vmatmul.mubr.f32.gmra.mxu0 %v1124
    %v1274 = vpop.f32.mrf.mxu0
    %v1275 = vadd.f32 %v153, %v1274
    %v1276 = vpop.f32.mrf.mxu0
    %1277 = vdwg.mxu0
    %v1280 = vcombine.low %v1204, %v1206
    %v1282 = vunpack.c.l.s4 1966171168
    %v1283 = vunpack.c.0.s8 %v1282
    %v1284 = vlaneseq
    %v1285 = vshrl.u32 %v1284, 7
    %v1286 = vsub.s32 %v1283, %v1285
    %v1287 = vrot.slane %v1280, %v1286
    %v1289 = vunpack.c.l.s4 1966171168
    %v1290 = vunpack.c.0.s8 %v1289
    %v1291 = vlaneseq
    %v1292 = vshrl.u32 %v1291, 7
    %v1293 = vsub.s32 %v1290, %v1292
    %v1294 = vrot.slane %v1287, %v1293
    %v1296 = vadd.f32 %v1136, %v1294
    %v1297 = vxor.u32 %v1296, 2147483648
    %v1298 = vmul.f32 %v1297, 1.442695
    %v1299 = vpow.pop %v1298
    %v1300 = vadd.f32 %v1299, 1.0
    %v1301 = vrcp.pop %v1300
    %v1302 = vmul.f32 1.0, %v1301
    %v1303 = vmul.f32 %v1302, %v1275
    %v1305 = vrot.slane %v1136, 2
    %v1307 = vadd.f32 %v1305, %v1303
    %v1308 = vtanh.pop %v1307
    %v1310 = vrot.slane %v1302, 1
    %v1312 = vsub.f32 1.0, %v1310
    %v1313 = vmul.f32 %v1312, %v1308
    %v1314 = vmul.f32 %v1310, %v1124
    %v1315 = vadd.f32 %v1313, %v1314
    %p1316 = scmp.lt.s32.totalorder %s1126, 8
    %s1317 = scalar_select %p1316, 1, 0
    %v1318 = vstv %s1317
    %vm1319 = vcmp.eq.s32.totalorder %v1318, 1
    %v1320 = vsel %vm1319, %v1315, %v1124
    %1321 = vst [vmem:[#allocation3 + $0x5] sm:$0x1] %v1320
    %s1322 = sadd.s32 %s80, 6
    %s1323 = sld [smem:[#allocation5 + %s1322]]
    %s1324 = sshra.s32 %s1323, 3
    %s1325 = sand.u32 %s1323, 7
    %s1326 = sshra.s32 %s1323, 3
    %s1327 = sand.u32 %s1323, 7
    %s1328 = smul.u32 %s1324, 3
    %s1329 = smul.u32 %s1328, 8
    %s1330 = sadd.s32 %s1329, %s1327
    %s1331 = scalar_lea.vmem [#allocation6], %s1330
    %v1332 = vld [vmem:[%s1331] ss:$8 sm:$0x7]
    %1333 = vmatprep.subr.mxu0 %v127
    %1334 = vmatpush1.msra.mxu0 %v126
    %1335 = vmatprep.subr.mxu0 %v124
    %1336 = vmatpush1.msra.mxu0 %v123
    %1337 = vmatprep.subr.mxu0 %v121
    %1338 = vmatpush1.msra.mxu0 %v120
    %1339 = vmatprep.subr.mxu0 %v118
    %1340 = vmatpush1.msra.mxu0 %v117
    %1341 = vmatprep.subr.mxu0 %v115
    %1342 = vmatpush1.msra.mxu0 %v114
    %1343 = vmatprep.subr.mxu0 %v112
    %1344 = vmatpush1.msra.mxu0 %v111
    %1345 = vmatprep.subr.mxu0 %v109
    %1346 = vmatpush1.msra.mxu0 %v108
    %1347 = vmatprep.subr.mxu0 %v106
    %1348 = vmatpush1.msra.mxu0 %v105
    %1349 = vmatprep.subr.mxu0 %v103
    %1350 = vmatpush1.msra.mxu0 %v102
    %1351 = vmatprep.subr.mxu0 %v100
    %1352 = vmatpush1.msra.mxu0 %v99
    %1353 = vmatprep.subr.mxu0 %v97
    %1354 = vmatpush1.msra.mxu0 %v96
    %1355 = vmatprep.subr.mxu0 %v94
    %1356 = vmatpush1.msra.mxu0 %v93
    %1357 = vmatprep.subr.mxu0 %v91
    %1358 = vmatpush1.msra.mxu0 %v90
    %1359 = vmatprep.subr.mxu0 %v88
    %1360 = vmatpush1.msra.mxu0 %v87
    %1361 = vmatprep.subr.mxu0 %v85
    %1362 = vmatpush1.msra.mxu0 %v84
    %1363 = vmatprep.subr.mxu0 %v82
    %1364 = vmatpush1.msra.mxu0 %v81
    %1365 = vmatprep.subr.mxu0 0.0
    %1366 = vmatpush2.msra.mxu0 0.0
    %1367 = vmatprep.subr.mxu0 0.0
    %1368 = vmatpush2.msra.mxu0 0.0
    %1369 = vmatprep.subr.mxu0 0.0
    %1370 = vmatpush2.msra.mxu0 0.0
    %1371 = vmatprep.subr.mxu0 0.0
    %1372 = vmatpush2.msra.mxu0 0.0
    %1373 = vmatprep.subr.mxu0 0.0
    %1374 = vmatpush2.msra.mxu0 0.0
    %1375 = vmatprep.subr.mxu0 0.0
    %1376 = vmatpush2.msra.mxu0 0.0
    %1377 = vmatprep.subr.mxu0 0.0
    %1378 = vmatpush2.msra.mxu0 0.0
    %1379 = vmatprep.subr.mxu0 0.0
    %1380 = vmatpush2.msra.mxu0 0.0
    %1381 = vmatprep.subr.mxu0 0.0
    %1382 = vmatpush2.msra.mxu0 0.0
    %1383 = vmatprep.subr.mxu0 0.0
    %1384 = vmatpush2.msra.mxu0 0.0
    %1385 = vmatprep.subr.mxu0 0.0
    %1386 = vmatpush2.msra.mxu0 0.0
    %1387 = vmatprep.subr.mxu0 0.0
    %1388 = vmatpush2.msra.mxu0 0.0
    %1389 = vmatprep.subr.mxu0 0.0
    %1390 = vmatpush2.msra.mxu0 0.0
    %1391 = vmatprep.subr.mxu0 0.0
    %1392 = vmatpush2.msra.mxu0 0.0
    %1393 = vmatprep.subr.mxu0 0.0
    %1394 = vmatpush2.msra.mxu0 0.0
    %1395 = vmatprep.subr.mxu0 0.0
    %1396 = vmatpush2.msra.mxu0 0.0
    %1397 = vmatprep.mubr.f32.mxu0 0.0
    %1398 = vmatmul.mubr.f32.gmra.mxu0 %v1320
    %v1399 = vpop.f32.mrf.mxu0
    %v1400 = vadd.f32 %v145, %v1399
    %v1401 = vpop.f32.mrf.mxu0
    %v1402 = vadd.f32 %v149, %v1401
    %1403 = vdwg.mxu0
    %1404 = vmatprep.subr.mxu0 0.0
    %1405 = vmatpush1.msra.mxu0 %v128
    %1406 = vmatprep.subr.mxu0 0.0
    %1407 = vmatpush1.msra.mxu0 %v125
    %1408 = vmatprep.subr.mxu0 0.0
    %1409 = vmatpush1.msra.mxu0 %v122
    %1410 = vmatprep.subr.mxu0 0.0
    %1411 = vmatpush1.msra.mxu0 %v119
    %1412 = vmatprep.subr.mxu0 0.0
    %1413 = vmatpush1.msra.mxu0 %v116
    %1414 = vmatprep.subr.mxu0 0.0
    %1415 = vmatpush1.msra.mxu0 %v113
    %1416 = vmatprep.subr.mxu0 0.0
    %1417 = vmatpush1.msra.mxu0 %v110
    %1418 = vmatprep.subr.mxu0 0.0
    %1419 = vmatpush1.msra.mxu0 %v107
    %1420 = vmatprep.subr.mxu0 0.0
    %1421 = vmatpush1.msra.mxu0 %v104
    %1422 = vmatprep.subr.mxu0 0.0
    %1423 = vmatpush1.msra.mxu0 %v101
    %1424 = vmatprep.subr.mxu0 0.0
    %1425 = vmatpush1.msra.mxu0 %v98
    %1426 = vmatprep.subr.mxu0 0.0
    %1427 = vmatpush1.msra.mxu0 %v95
    %1428 = vmatprep.subr.mxu0 0.0
    %1429 = vmatpush1.msra.mxu0 %v92
    %1430 = vmatprep.subr.mxu0 0.0
    %1431 = vmatpush1.msra.mxu0 %v89
    %1432 = vmatprep.subr.mxu0 0.0
    %1433 = vmatpush1.msra.mxu0 %v86
    %1434 = vmatprep.subr.mxu0 0.0
    %1435 = vmatpush1.msra.mxu0 %v83
    %1436 = vmatprep.subr.mxu0 0.0
    %1437 = vmatpush2.msra.mxu0 0.0
    %1438 = vmatprep.subr.mxu0 0.0
    %1439 = vmatpush2.msra.mxu0 0.0
    %1440 = vmatprep.subr.mxu0 0.0
    %1441 = vmatpush2.msra.mxu0 0.0
    %1442 = vmatprep.subr.mxu0 0.0
    %1443 = vmatpush2.msra.mxu0 0.0
    %1444 = vmatprep.subr.mxu0 0.0
    %1445 = vmatpush2.msra.mxu0 0.0
    %1446 = vmatprep.subr.mxu0 0.0
    %1447 = vmatpush2.msra.mxu0 0.0
    %1448 = vmatprep.subr.mxu0 0.0
    %1449 = vmatpush2.msra.mxu0 0.0
    %1450 = vmatprep.subr.mxu0 0.0
    %1451 = vmatpush2.msra.mxu0 0.0
    %1452 = vmatprep.subr.mxu0 0.0
    %1453 = vmatpush2.msra.mxu0 0.0
    %1454 = vmatprep.subr.mxu0 0.0
    %1455 = vmatpush2.msra.mxu0 0.0
    %1456 = vmatprep.subr.mxu0 0.0
    %1457 = vmatpush2.msra.mxu0 0.0
    %1458 = vmatprep.subr.mxu0 0.0
    %1459 = vmatpush2.msra.mxu0 0.0
    %1460 = vmatprep.subr.mxu0 0.0
    %1461 = vmatpush2.msra.mxu0 0.0
    %1462 = vmatprep.subr.mxu0 0.0
    %1463 = vmatpush2.msra.mxu0 0.0
    %1464 = vmatprep.subr.mxu0 0.0
    %1465 = vmatpush2.msra.mxu0 0.0
    %1466 = vmatprep.subr.mxu0 0.0
    %1467 = vmatpush2.msra.mxu0 0.0
    %1468 = vmatprep.mubr.f32.mxu0 0.0
    %1469 = vmatmul.mubr.f32.gmra.mxu0 %v1320
    %v1470 = vpop.f32.mrf.mxu0
    %v1471 = vadd.f32 %v153, %v1470
    %v1472 = vpop.f32.mrf.mxu0
    %1473 = vdwg.mxu0
    %v1476 = vcombine.low %v1400, %v1402
    %v1478 = vunpack.c.l.s4 1966171168
    %v1479 = vunpack.c.0.s8 %v1478
    %v1480 = vlaneseq
    %v1481 = vshrl.u32 %v1480, 7
    %v1482 = vsub.s32 %v1479, %v1481
    %v1483 = vrot.slane %v1476, %v1482
    %v1485 = vunpack.c.l.s4 1966171168
    %v1486 = vunpack.c.0.s8 %v1485
    %v1487 = vlaneseq
    %v1488 = vshrl.u32 %v1487, 7
    %v1489 = vsub.s32 %v1486, %v1488
    %v1490 = vrot.slane %v1483, %v1489
    %v1492 = vadd.f32 %v1332, %v1490
    %v1493 = vxor.u32 %v1492, 2147483648
    %v1494 = vmul.f32 %v1493, 1.442695
    %v1495 = vpow.pop %v1494
    %v1496 = vadd.f32 %v1495, 1.0
    %v1497 = vrcp.pop %v1496
    %v1498 = vmul.f32 1.0, %v1497
    %v1499 = vmul.f32 %v1498, %v1471
    %v1501 = vrot.slane %v1332, 2
    %v1503 = vadd.f32 %v1501, %v1499
    %v1504 = vtanh.pop %v1503
    %v1506 = vrot.slane %v1498, 1
    %v1508 = vsub.f32 1.0, %v1506
    %v1509 = vmul.f32 %v1508, %v1504
    %v1510 = vmul.f32 %v1506, %v1320
    %v1511 = vadd.f32 %v1509, %v1510
    %p1512 = scmp.lt.s32.totalorder %s1322, 8
    %s1513 = scalar_select %p1512, 1, 0
    %v1514 = vstv %s1513
    %vm1515 = vcmp.eq.s32.totalorder %v1514, 1
    %v1516 = vsel %vm1515, %v1511, %v1320
    %1517 = vst [vmem:[#allocation3 + $0x6] sm:$0x1] %v1516
    %s1518 = sadd.s32 %s80, 7
    %s1519 = sld [smem:[#allocation5 + %s1518]]
    %s1520 = sshra.s32 %s1519, 3
    %s1521 = sand.u32 %s1519, 7
    %s1522 = sshra.s32 %s1519, 3
    %s1523 = sand.u32 %s1519, 7
    %s1524 = smul.u32 %s1520, 3
    %s1525 = smul.u32 %s1524, 8
    %s1526 = sadd.s32 %s1525, %s1523
    %s1527 = scalar_lea.vmem [#allocation6], %s1526
    %v1528 = vld [vmem:[%s1527] ss:$8 sm:$0x7]
    %1529 = vmatprep.subr.mxu0 %v127
    %1530 = vmatpush1.msra.mxu0 %v126
    %1531 = vmatprep.subr.mxu0 %v124
    %1532 = vmatpush1.msra.mxu0 %v123
    %1533 = vmatprep.subr.mxu0 %v121
    %1534 = vmatpush1.msra.mxu0 %v120
    %1535 = vmatprep.subr.mxu0 %v118
    %1536 = vmatpush1.msra.mxu0 %v117
    %1537 = vmatprep.subr.mxu0 %v115
    %1538 = vmatpush1.msra.mxu0 %v114
    %1539 = vmatprep.subr.mxu0 %v112
    %1540 = vmatpush1.msra.mxu0 %v111
    %1541 = vmatprep.subr.mxu0 %v109
    %1542 = vmatpush1.msra.mxu0 %v108
    %1543 = vmatprep.subr.mxu0 %v106
    %1544 = vmatpush1.msra.mxu0 %v105
    %1545 = vmatprep.subr.mxu0 %v103
    %1546 = vmatpush1.msra.mxu0 %v102
    %1547 = vmatprep.subr.mxu0 %v100
    %1548 = vmatpush1.msra.mxu0 %v99
    %1549 = vmatprep.subr.mxu0 %v97
    %1550 = vmatpush1.msra.mxu0 %v96
    %1551 = vmatprep.subr.mxu0 %v94
    %1552 = vmatpush1.msra.mxu0 %v93
    %1553 = vmatprep.subr.mxu0 %v91
    %1554 = vmatpush1.msra.mxu0 %v90
    %1555 = vmatprep.subr.mxu0 %v88
    %1556 = vmatpush1.msra.mxu0 %v87
    %1557 = vmatprep.subr.mxu0 %v85
    %1558 = vmatpush1.msra.mxu0 %v84
    %1559 = vmatprep.subr.mxu0 %v82
    %1560 = vmatpush1.msra.mxu0 %v81
    %1561 = vmatprep.subr.mxu0 0.0
    %1562 = vmatpush2.msra.mxu0 0.0
    %1563 = vmatprep.subr.mxu0 0.0
    %1564 = vmatpush2.msra.mxu0 0.0
    %1565 = vmatprep.subr.mxu0 0.0
    %1566 = vmatpush2.msra.mxu0 0.0
    %1567 = vmatprep.subr.mxu0 0.0
    %1568 = vmatpush2.msra.mxu0 0.0
    %1569 = vmatprep.subr.mxu0 0.0
    %1570 = vmatpush2.msra.mxu0 0.0
    %1571 = vmatprep.subr.mxu0 0.0
    %1572 = vmatpush2.msra.mxu0 0.0
    %1573 = vmatprep.subr.mxu0 0.0
    %1574 = vmatpush2.msra.mxu0 0.0
    %1575 = vmatprep.subr.mxu0 0.0
    %1576 = vmatpush2.msra.mxu0 0.0
    %1577 = vmatprep.subr.mxu0 0.0
    %1578 = vmatpush2.msra.mxu0 0.0
    %1579 = vmatprep.subr.mxu0 0.0
    %1580 = vmatpush2.msra.mxu0 0.0
    %1581 = vmatprep.subr.mxu0 0.0
    %1582 = vmatpush2.msra.mxu0 0.0
    %1583 = vmatprep.subr.mxu0 0.0
    %1584 = vmatpush2.msra.mxu0 0.0
    %1585 = vmatprep.subr.mxu0 0.0
    %1586 = vmatpush2.msra.mxu0 0.0
    %1587 = vmatprep.subr.mxu0 0.0
    %1588 = vmatpush2.msra.mxu0 0.0
    %1589 = vmatprep.subr.mxu0 0.0
    %1590 = vmatpush2.msra.mxu0 0.0
    %1591 = vmatprep.subr.mxu0 0.0
    %1592 = vmatpush2.msra.mxu0 0.0
    %1593 = vmatprep.mubr.f32.mxu0 0.0
    %1594 = vmatmul.mubr.f32.gmra.mxu0 %v1516
    %v1595 = vpop.f32.mrf.mxu0
    %v1596 = vadd.f32 %v145, %v1595
    %v1597 = vpop.f32.mrf.mxu0
    %v1598 = vadd.f32 %v149, %v1597
    %1599 = vdwg.mxu0
    %1600 = vmatprep.subr.mxu0 0.0
    %1601 = vmatpush1.msra.mxu0 %v128
    %1602 = vmatprep.subr.mxu0 0.0
    %1603 = vmatpush1.msra.mxu0 %v125
    %1604 = vmatprep.subr.mxu0 0.0
    %1605 = vmatpush1.msra.mxu0 %v122
    %1606 = vmatprep.subr.mxu0 0.0
    %1607 = vmatpush1.msra.mxu0 %v119
    %1608 = vmatprep.subr.mxu0 0.0
    %1609 = vmatpush1.msra.mxu0 %v116
    %1610 = vmatprep.subr.mxu0 0.0
    %1611 = vmatpush1.msra.mxu0 %v113
    %1612 = vmatprep.subr.mxu0 0.0
    %1613 = vmatpush1.msra.mxu0 %v110
    %1614 = vmatprep.subr.mxu0 0.0
    %1615 = vmatpush1.msra.mxu0 %v107
    %1616 = vmatprep.subr.mxu0 0.0
    %1617 = vmatpush1.msra.mxu0 %v104
    %1618 = vmatprep.subr.mxu0 0.0
    %1619 = vmatpush1.msra.mxu0 %v101
    %1620 = vmatprep.subr.mxu0 0.0
    %1621 = vmatpush1.msra.mxu0 %v98
    %1622 = vmatprep.subr.mxu0 0.0
    %1623 = vmatpush1.msra.mxu0 %v95
    %1624 = vmatprep.subr.mxu0 0.0
    %1625 = vmatpush1.msra.mxu0 %v92
    %1626 = vmatprep.subr.mxu0 0.0
    %1627 = vmatpush1.msra.mxu0 %v89
    %1628 = vmatprep.subr.mxu0 0.0
    %1629 = vmatpush1.msra.mxu0 %v86
    %1630 = vmatprep.subr.mxu0 0.0
    %1631 = vmatpush1.msra.mxu0 %v83
    %1632 = vmatprep.subr.mxu0 0.0
    %1633 = vmatpush2.msra.mxu0 0.0
    %1634 = vmatprep.subr.mxu0 0.0
    %1635 = vmatpush2.msra.mxu0 0.0
    %1636 = vmatprep.subr.mxu0 0.0
    %1637 = vmatpush2.msra.mxu0 0.0
    %1638 = vmatprep.subr.mxu0 0.0
    %1639 = vmatpush2.msra.mxu0 0.0
    %1640 = vmatprep.subr.mxu0 0.0
    %1641 = vmatpush2.msra.mxu0 0.0
    %1642 = vmatprep.subr.mxu0 0.0
    %1643 = vmatpush2.msra.mxu0 0.0
    %1644 = vmatprep.subr.mxu0 0.0
    %1645 = vmatpush2.msra.mxu0 0.0
    %1646 = vmatprep.subr.mxu0 0.0
    %1647 = vmatpush2.msra.mxu0 0.0
    %1648 = vmatprep.subr.mxu0 0.0
    %1649 = vmatpush2.msra.mxu0 0.0
    %1650 = vmatprep.subr.mxu0 0.0
    %1651 = vmatpush2.msra.mxu0 0.0
    %1652 = vmatprep.subr.mxu0 0.0
    %1653 = vmatpush2.msra.mxu0 0.0
    %1654 = vmatprep.subr.mxu0 0.0
    %1655 = vmatpush2.msra.mxu0 0.0
    %1656 = vmatprep.subr.mxu0 0.0
    %1657 = vmatpush2.msra.mxu0 0.0
    %1658 = vmatprep.subr.mxu0 0.0
    %1659 = vmatpush2.msra.mxu0 0.0
    %1660 = vmatprep.subr.mxu0 0.0
    %1661 = vmatpush2.msra.mxu0 0.0
    %1662 = vmatprep.subr.mxu0 0.0
    %1663 = vmatpush2.msra.mxu0 0.0
    %1664 = vmatprep.mubr.f32.mxu0 0.0
    %1665 = vmatmul.mubr.f32.gmra.mxu0 %v1516
    %v1666 = vpop.f32.mrf.mxu0
    %v1667 = vadd.f32 %v153, %v1666
    %v1668 = vpop.f32.mrf.mxu0
    %1669 = vdwg.mxu0
    %v1672 = vcombine.low %v1596, %v1598
    %v1674 = vunpack.c.l.s4 1966171168
    %v1675 = vunpack.c.0.s8 %v1674
    %v1676 = vlaneseq
    %v1677 = vshrl.u32 %v1676, 7
    %v1678 = vsub.s32 %v1675, %v1677
    %v1679 = vrot.slane %v1672, %v1678
    %v1681 = vunpack.c.l.s4 1966171168
    %v1682 = vunpack.c.0.s8 %v1681
    %v1683 = vlaneseq
    %v1684 = vshrl.u32 %v1683, 7
    %v1685 = vsub.s32 %v1682, %v1684
    %v1686 = vrot.slane %v1679, %v1685
    %v1688 = vadd.f32 %v1528, %v1686
    %v1689 = vxor.u32 %v1688, 2147483648
    %v1690 = vmul.f32 %v1689, 1.442695
    %v1691 = vpow.pop %v1690
    %v1692 = vadd.f32 %v1691, 1.0
    %v1693 = vrcp.pop %v1692
    %v1694 = vmul.f32 1.0, %v1693
    %v1695 = vmul.f32 %v1694, %v1667
    %v1697 = vrot.slane %v1528, 2
    %v1699 = vadd.f32 %v1697, %v1695
    %v1700 = vtanh.pop %v1699
    %v1702 = vrot.slane %v1694, 1
    %v1704 = vsub.f32 1.0, %v1702
    %v1705 = vmul.f32 %v1704, %v1700
    %v1706 = vmul.f32 %v1702, %v1516
    %v1707 = vadd.f32 %v1705, %v1706
    %p1708 = scmp.lt.s32.totalorder %s1518, 8
    %s1709 = scalar_select %p1708, 1, 0
    %v1710 = vstv %s1709
    %vm1711 = vcmp.eq.s32.totalorder %v1710, 1
    %v1712 = vsel %vm1711, %v1707, %v1516
    %1713 = vst [vmem:[#allocation3 + $0x7] sm:$0x1] %v1712
    %1714 = vst [vmem:[#allocation2] sm:$0x1] %v1712
    %1715 = vst [vmem:[%s8] sm:$0x1] %v1712
    %v1716 = vld [vmem:[#allocation3] sm:$0xff]
    %v1717 = vld [vmem:[#allocation11] sm:$0xff]
    %v1718 = vld [vmem:[#allocation11 + $0x8] sm:$0xff]
    %v1719 = vld [vmem:[#allocation11 + $0x10] sm:$0xff]
    %v1720 = vld [vmem:[#allocation11 + $0x18] sm:$0xff]
    %v1721 = vld [vmem:[#allocation11 + $0x20] sm:$0xff]
    %v1722 = vld [vmem:[#allocation11 + $0x28] sm:$0xff]
    %v1723 = vld [vmem:[#allocation11 + $0x30] sm:$0xff]
    %v1724 = vld [vmem:[#allocation11 + $0x38] sm:$0xff]
    %v1725 = vld [vmem:[#allocation11 + $0x40] sm:$0xff]
    %v1726 = vld [vmem:[#allocation11 + $0x48] sm:$0xff]
    %v1727 = vld [vmem:[#allocation11 + $0x50] sm:$0xff]
    %v1728 = vld [vmem:[#allocation11 + $0x58] sm:$0xff]
    %v1729 = vld [vmem:[#allocation11 + $0x60] sm:$0xff]
    %v1730 = vld [vmem:[#allocation11 + $0x68] sm:$0xff]
    %v1731 = vld [vmem:[#allocation11 + $0x70] sm:$0xff]
    %v1732 = vld [vmem:[#allocation11 + $0x78] sm:$0xff]
    %v1733 = vld [vmem:[%s5] sm:$0x1]
    %v1735 = vlaneseq
    %v1736 = vshrl.u32 %v1735, 7
    %v1737 = vsub.s32 0, %v1736
    %v1738 = vrot.slane %v1733, %v1737
    %1740 = vmatprep.subr.mxu0 0.0
    %1741 = vmatpush1.msra.mxu0 %v1732
    %1742 = vmatprep.subr.mxu0 0.0
    %1743 = vmatpush1.msra.mxu0 %v1731
    %1744 = vmatprep.subr.mxu0 0.0
    %1745 = vmatpush1.msra.mxu0 %v1730
    %1746 = vmatprep.subr.mxu0 0.0
    %1747 = vmatpush1.msra.mxu0 %v1729
    %1748 = vmatprep.subr.mxu0 0.0
    %1749 = vmatpush1.msra.mxu0 %v1728
    %1750 = vmatprep.subr.mxu0 0.0
    %1751 = vmatpush1.msra.mxu0 %v1727
    %1752 = vmatprep.subr.mxu0 0.0
    %1753 = vmatpush1.msra.mxu0 %v1726
    %1754 = vmatprep.subr.mxu0 0.0
    %1755 = vmatpush1.msra.mxu0 %v1725
    %1756 = vmatprep.subr.mxu0 0.0
    %1757 = vmatpush1.msra.mxu0 %v1724
    %1758 = vmatprep.subr.mxu0 0.0
    %1759 = vmatpush1.msra.mxu0 %v1723
    %1760 = vmatprep.subr.mxu0 0.0
    %1761 = vmatpush1.msra.mxu0 %v1722
    %1762 = vmatprep.subr.mxu0 0.0
    %1763 = vmatpush1.msra.mxu0 %v1721
    %1764 = vmatprep.subr.mxu0 0.0
    %1765 = vmatpush1.msra.mxu0 %v1720
    %1766 = vmatprep.subr.mxu0 0.0
    %1767 = vmatpush1.msra.mxu0 %v1719
    %1768 = vmatprep.subr.mxu0 0.0
    %1769 = vmatpush1.msra.mxu0 %v1718
    %1770 = vmatprep.subr.mxu0 0.0
    %1771 = vmatpush1.msra.mxu0 %v1717
    %1772 = vmatprep.subr.mxu0 0.0
    %1773 = vmatpush2.msra.mxu0 0.0
    %1774 = vmatprep.subr.mxu0 0.0
    %1775 = vmatpush2.msra.mxu0 0.0
    %1776 = vmatprep.subr.mxu0 0.0
    %1777 = vmatpush2.msra.mxu0 0.0
    %1778 = vmatprep.subr.mxu0 0.0
    %1779 = vmatpush2.msra.mxu0 0.0
    %1780 = vmatprep.subr.mxu0 0.0
    %1781 = vmatpush2.msra.mxu0 0.0
    %1782 = vmatprep.subr.mxu0 0.0
    %1783 = vmatpush2.msra.mxu0 0.0
    %1784 = vmatprep.subr.mxu0 0.0
    %1785 = vmatpush2.msra.mxu0 0.0
    %1786 = vmatprep.subr.mxu0 0.0
    %1787 = vmatpush2.msra.mxu0 0.0
    %1788 = vmatprep.subr.mxu0 0.0
    %1789 = vmatpush2.msra.mxu0 0.0
    %1790 = vmatprep.subr.mxu0 0.0
    %1791 = vmatpush2.msra.mxu0 0.0
    %1792 = vmatprep.subr.mxu0 0.0
    %1793 = vmatpush2.msra.mxu0 0.0
    %1794 = vmatprep.subr.mxu0 0.0
    %1795 = vmatpush2.msra.mxu0 0.0
    %1796 = vmatprep.subr.mxu0 0.0
    %1797 = vmatpush2.msra.mxu0 0.0
    %1798 = vmatprep.subr.mxu0 0.0
    %1799 = vmatpush2.msra.mxu0 0.0
    %1800 = vmatprep.subr.mxu0 0.0
    %1801 = vmatpush2.msra.mxu0 0.0
    %1802 = vmatprep.subr.mxu0 0.0
    %1803 = vmatpush2.msra.mxu0 0.0
    %1804 = vmatprep.mubr.f32.mxu0 0.0
    %1805 = vmatmul.mubr.f32.gmra.mxu0 %v1716
    %v1806 = vpop.f32.mrf.mxu0
    %v1807 = vadd.f32 %v1738, %v1806
    %v1808 = vpop.f32.mrf.mxu0
    %1809 = vdwg.mxu0
    %1810 = vst [vmem:[#allocation12] sm:$0xff] %v1807
    // Predicated region
    $region42: #{rnn_forward_sequence.1} parent=1 // pred_check
      _
    $region43: #{rnn_forward_sequence.1} parent=1 // pred_check_branch
      %1812 = sbr.rel (0) target = $region45
    $region44: #{rnn_forward_sequence.1} parent=1 // pred_region
      %s1814 = ssub.s32 128, 128
      %1815 = vsyncadd [#allocation8], %s1814
      %s1817 = sshll.u32 [#allocation12], 4
      %s1818 = int_to_ptr.vmem [resolvable:$true] %s1817
      %1820 = dma.vmem_to_hbm [thread:$0]  %s1818, 128, %s7, [#allocation8]
    $region45: #{rnn_forward_sequence.1} parent=1 // pred_fallthru
      _
    // Predicated region
    $region46: #{rnn_forward_sequence.1} parent=1 // pred_check
      _
    $region47: #{rnn_forward_sequence.1} parent=1 // pred_check_branch
      %1822 = sbr.rel (0) target = $region49
    $region48: #{rnn_forward_sequence.1} parent=1 // pred_region
      _
    $region49: #{rnn_forward_sequence.1} parent=1 // pred_fallthru
      _
    // Predicated region
    $region50: #{rnn_forward_sequence.1} parent=1 // pred_check
      _
    $region51: #{rnn_forward_sequence.1} parent=1 // pred_check_branch
      %1824 = sbr.rel (0) target = $region53
    $region52: #{rnn_forward_sequence.1} parent=1 // pred_region
      %1825 = dma.done [#allocation8], 128
    $region53: #{rnn_forward_sequence.1} parent=1 // pred_fallthru
      _
    // Predicated region
    $region54: #{rnn_forward_sequence.1} parent=1 // pred_check
      _
    $region55: #{rnn_forward_sequence.1} parent=1 // pred_check_branch
      %1827 = sbr.rel (0) target = $region57
    $region56: #{rnn_forward_sequence.1} parent=1 // pred_region
      _
    $region57: #{rnn_forward_sequence.1} parent=1 // pred_fallthru
      _
    %1828 = vsyncpa [#allocation7], 1
    %1829 = vsyncpa [#allocation10], 1
    %1830 = vsyncpa [#allocation8], 1

</llo_original>
